<compile_context>
chip_gen: v5e
topology: v5e:2x2
jax: 0.10.0
libtpu: 0.0.40
codegen_flags: <defaults>
</compile_context>

<pallas_src>
import functools

import jax
import jax.numpy as jnp
from jax.experimental import pallas as pl
from jax.experimental.pallas import tpu as pltpu


def _conv2d_block_kernel(x_ref, w_ref, b_ref, o_ref, patches_ref, *,
                         kh_size, kw_size, ho, wo, stride, padding,
                         activation, k_real, k_pad):
    # x_ref:       (B, Cin, H, W)      unpadded NCHW block (B images per grid step)
    # w_ref:       (Cout, K_pad)       flattened filter, zero-padded contraction dim
    # b_ref:       (Cout, 1)
    # o_ref:       (B, Cout, Ho*Wo)    lane-dense output block
    # patches_ref: VMEM (K_pad, B*Ho*Wo) im2col scratch, images packed along lanes
    bsz = x_ref.shape[0]
    cin = x_ref.shape[1]
    h_in = x_ref.shape[2]
    w_in = x_ref.shape[3]
    hw = ho * wo
    dt = x_ref.dtype

    # Zero only the padded tail rows of the patches scratch (uninitialized VMEM
    # could hold NaN; 0*NaN would poison the matmul).  Real rows are fully
    # overwritten below.  Done every step so it is megacore-safe.
    if k_pad > k_real:
        patches_ref[k_real:, :] = jnp.zeros((k_pad - k_real, bsz * hw), dt)

    if padding > 0:
        zcol = jnp.zeros((cin, h_in, padding), dt)
        zrow = jnp.zeros((cin, padding, w_in + 2 * padding), dt)

    # im2col directly into the lane-dense patches scratch.  Rows ordered
    # (kh, kw, ci) to match w_ref flattening; each image occupies its own
    # 128-aligned lane range [b*Ho*Wo, (b+1)*Ho*Wo).
    for b in range(bsz):
        x_img = x_ref[b]                                         # (Cin, H, W)
        if padding > 0:
            # Padded tile built in vregs: no scratch zero-fill, no masked interior
            # store, no reload.
            xp = jnp.concatenate([zcol, x_img, zcol], axis=2)    # (Cin, H,  Wp)
            xp = jnp.concatenate([zrow, xp, zrow], axis=1)       # (Cin, Hp, Wp)
        else:
            xp = x_img
        t = 0
        for kh in range(kh_size):
            for kw in range(kw_size):
                win = xp[:, kh:kh + (ho - 1) * stride + 1:stride,
                            kw:kw + (wo - 1) * stride + 1:stride]  # (Cin, Ho, Wo)
                patches_ref[t * cin:(t + 1) * cin,
                            b * hw:(b + 1) * hw] = win.reshape(cin, hw)
                t += 1

    # Single MXU contraction over all images in this step: (Cout, B*Ho*Wo).
    acc = jnp.dot(w_ref[...], patches_ref[...],
                  preferred_element_type=jnp.float32)
    acc = acc + b_ref[...].astype(jnp.float32)                    # conv bias

    # TODO(synk): norm='bn' (training-mode batch stats) and activation='prelu'
    # (learnable parameter) are not implemented; this config uses 'none'/'relu'.
    if activation == "relu":
        acc = jnp.maximum(acc, 0.0)
    elif activation == "lrelu":
        acc = jnp.where(acc >= 0, acc, 0.2 * acc)                 # LeakyReLU(0.2)
    elif activation == "selu":
        alpha = 1.6732632423543772
        scale = 1.0507009873554805
        acc = scale * jnp.where(acc > 0, acc, alpha * (jnp.exp(acc) - 1.0))
    elif activation == "tanh":
        acc = jnp.tanh(acc)
    # activation == 'none' -> identity

    # Per-image lane slices at 128-aligned offsets -> unmasked stores.
    for b in range(bsz):
        o_ref[b] = acc[:, b * hw:(b + 1) * hw].astype(o_ref.dtype)


def conv2d_block(x_nchw, weight_oihw, bias, *, stride=1, padding=0, norm="none",
                 activation="none", pad_type="zero", images_per_step=None):
    if norm == "bn":
        # TODO(synk): BatchNorm2d (training-mode batch statistics) not implemented.
        raise NotImplementedError("norm='bn' is not implemented")
    if norm not in ("none", "sn"):
        raise ValueError(f"Unsupported normalization: {norm}")
    if activation == "prelu":
        # TODO(synk): PReLU (learnable slope) not implemented.
        raise NotImplementedError("activation='prelu' is not implemented")
    if activation not in ("relu", "lrelu", "selu", "tanh", "none"):
        raise ValueError(f"Unsupported activation: {activation}")

    n, cin, h, w = x_nchw.shape
    cout, _, kh, kw = weight_oihw.shape

    if pad_type == "zero":
        x_eff, pad_eff = x_nchw, padding                    # padding fused into kernel
    elif pad_type in ("reflect", "replicate"):
        # Non-zero pad modes: tiny wrapper-side pad; kernel pad = 0.
        mode = "reflect" if pad_type == "reflect" else "edge"
        x_eff = jnp.pad(x_nchw,
                        ((0, 0), (0, 0), (padding, padding), (padding, padding)),
                        mode=mode)
        pad_eff = 0
    else:
        raise ValueError(f"Unsupported padding type: {pad_type}")

    _, _, h_eff, w_eff = x_eff.shape
    hp = h_eff + 2 * pad_eff
    wp = w_eff + 2 * pad_eff
    ho = (hp - kh) // stride + 1
    wo = (wp - kw) // stride + 1
    hw = ho * wo

    # Images per grid step: batch to amortize per-step overhead, but keep >=2
    # 'parallel' steps when N >= 2 so v7x's two TensorCores both get work.
    if images_per_step is None:
        bstep = pl.cdiv(n, 2) if n >= 2 else 1
    else:
        bstep = max(1, min(int(images_per_step), n))
    num_steps = pl.cdiv(n, bstep)
    n_pad = num_steps * bstep
    if n_pad != n:
        x_eff = jnp.pad(x_eff, ((0, n_pad - n), (0, 0), (0, 0), (0, 0)))

    # Flatten filter OIHW -> (Cout, KH*KW*Cin) matching im2col row order, then
    # zero-pad the contraction dim to a multiple of 8 (free MXU/sublane alignment).
    k_real = kh * kw * cin
    k_pad = ((k_real + 7) // 8) * 8
    w_flat = jnp.transpose(weight_oihw, (0, 2, 3, 1)).reshape(cout, k_real)
    if k_pad != k_real:
        w_flat = jnp.pad(w_flat, ((0, 0), (0, k_pad - k_real)))
    b2 = bias.reshape(cout, 1)

    kern = functools.partial(_conv2d_block_kernel, kh_size=kh, kw_size=kw,
                             ho=ho, wo=wo, stride=stride, padding=pad_eff,
                             activation=activation, k_real=k_real, k_pad=k_pad)

    out_flat = pl.pallas_call(
        kern,
        out_shape=jax.ShapeDtypeStruct((n_pad, cout, hw), x_nchw.dtype),
        grid_spec=pltpu.PrefetchScalarGridSpec(
            num_scalar_prefetch=0,
            grid=(num_steps,),
            in_specs=[
                pl.BlockSpec((bstep, cin, h_eff, w_eff), lambda i: (i, 0, 0, 0)),
                pl.BlockSpec((cout, k_pad), lambda i: (0, 0)),
                pl.BlockSpec((cout, 1), lambda i: (0, 0)),
            ],
            out_specs=pl.BlockSpec((bstep, cout, hw), lambda i: (i, 0, 0)),
            scratch_shapes=[pltpu.VMEM((k_pad, bstep * hw), x_nchw.dtype)],
        ),
        compiler_params=pltpu.CompilerParams(dimension_semantics=("parallel",)),
    )(x_eff, w_flat, b2)

    out = out_flat[:n] if n_pad != n else out_flat
    # Contiguous split of the last dim: layout-preserving, effectively free.
    return out.reshape(n, cout, ho, wo)


if __name__ == "__main__":
    key = jax.random.PRNGKey(0)
    kx, kw_, kb = jax.random.split(key, 3)

    N, Cin, H, W = 2, 4, 16, 16
    Cout, K, S, P = 8, 3, 1, 1

    x = jax.random.normal(kx, (N, Cin, H, W), jnp.float32)

    # Deterministic parameter init (same fan-in bound convention as nn.Conv2d).
    fan_in = Cin * K * K
    bound = 1.0 / (fan_in ** 0.5)
    weight = jax.random.uniform(kw_, (Cout, Cin, K, K), jnp.float32, -bound, bound)
    bias = jax.random.uniform(kb, (Cout,), jnp.float32, -bound, bound)

    out = conv2d_block(x, weight, bias, stride=S, padding=P,
                       norm="none", activation="relu", pad_type="zero")
    out = jax.block_until_ready(out)

    # Pure-JAX reference for correctness check.
    ref = jax.lax.conv_general_dilated(
        x, weight, window_strides=(S, S), padding=[(P, P), (P, P)],
        dimension_numbers=("NCHW", "OIHW", "NCHW"))
    ref = jax.nn.relu(ref + bias.reshape(1, Cout, 1, 1))

    assert out.shape == (N, Cout, H, W)
    assert jnp.allclose(out, ref, atol=1e-4, rtol=1e-4)
    print("KERNEL_OK")
</pallas_src>

<mosaic_0001>
module attributes {stable_mosaic.version = 11 : i64} {
  func.func @_conv2d_block_kernel(%arg0: i32, %arg1: memref<1x4x16x16xf32, #tpu.memory_space<vmem>>, %arg2: memref<8x40xf32, #tpu.memory_space<vmem>>, %arg3: memref<8x1xf32, #tpu.memory_space<vmem>>, %arg4: memref<1x8x256xf32, #tpu.memory_space<vmem>>, %arg5: memref<40x256xf32, #tpu.memory_space<vmem>>) attributes {dimension_semantics = [#tpu.dimension_semantics<parallel>], iteration_bounds = array<i64: 2>, scalar_prefetch = 0 : i64, scratch_operands = 1 : i64, tpu.core_type = #tpu.core_type<tc>, window_params = [{transform_indices = @transform_0, window_bounds = array<i64: 1, 4, 16, 16>}, {pipeline_mode = #tpu.pipeline_mode<synchronous>, transform_indices = @transform_1, window_bounds = array<i64: 8, 40>}, {pipeline_mode = #tpu.pipeline_mode<synchronous>, transform_indices = @transform_2, window_bounds = array<i64: 8, 1>}, {transform_indices = @transform_3, window_bounds = array<i64: 1, 8, 256>}]} {
    %cst = arith.constant 0.000000e+00 : f32
    %0 = vector.broadcast %cst : f32 to vector<4x256xf32>
    %c36 = arith.constant 36 : index
    %c0 = arith.constant 0 : index
    %1 = vector.load %arg5[%c36, %c0] : memref<40x256xf32, #tpu.memory_space<vmem>>, vector<4x256xf32>
    tpu.vector_store %arg5[%c36, %c0], %0 {strides = array<i32>} : memref<40x256xf32, #tpu.memory_space<vmem>>, vector<4x256xf32>,
    %cst_0 = arith.constant 0.000000e+00 : f32
    %2 = vector.broadcast %cst_0 : f32 to vector<4x16x1xf32>
    %cst_1 = arith.constant 0.000000e+00 : f32
    %3 = vector.broadcast %cst_1 : f32 to vector<4x1x18xf32>
    %c0_2 = arith.constant 0 : index
    %c0_3 = arith.constant 0 : index
    %c0_4 = arith.constant 0 : index
    %c0_5 = arith.constant 0 : index
    %4 = vector.load %arg1[%c0_2, %c0_3, %c0_4, %c0_5] : memref<1x4x16x16xf32, #tpu.memory_space<vmem>>, vector<1x4x16x16xf32>
    %5 = vector.shape_cast %4 : vector<1x4x16x16xf32> to vector<4x16x16xf32>
    %6 = tpu.concatenate %2, %5, %2 in 2 : vector<4x16x1xf32>, vector<4x16x16xf32>, vector<4x16x1xf32> -> vector<4x16x18xf32>
    %7 = tpu.concatenate %3, %6, %3 in 1 : vector<4x1x18xf32>, vector<4x16x18xf32>, vector<4x1x18xf32> -> vector<4x18x18xf32>
    %8 = vector.extract_strided_slice %7 {offsets = [0, 0, 0], sizes = [4, 16, 16], strides = [1, 1, 1]} : vector<4x18x18xf32> to vector<4x16x16xf32>
    %9 = vector.shape_cast %8 : vector<4x16x16xf32> to vector<4x256xf32>
    %c0_6 = arith.constant 0 : index
    %c0_7 = arith.constant 0 : index
    %10 = vector.load %arg5[%c0_6, %c0_7] : memref<40x256xf32, #tpu.memory_space<vmem>>, vector<4x256xf32>
    tpu.vector_store %arg5[%c0_6, %c0_7], %9 {strides = array<i32>} : memref<40x256xf32, #tpu.memory_space<vmem>>, vector<4x256xf32>,
    %11 = vector.extract_strided_slice %7 {offsets = [0, 0, 1], sizes = [4, 16, 16], strides = [1, 1, 1]} : vector<4x18x18xf32> to vector<4x16x16xf32>
    %12 = vector.shape_cast %11 : vector<4x16x16xf32> to vector<4x256xf32>
    %c4 = arith.constant 4 : index
    %c0_8 = arith.constant 0 : index
    %13 = vector.load %arg5[%c4, %c0_8] : memref<40x256xf32, #tpu.memory_space<vmem>>, vector<4x256xf32>
    tpu.vector_store %arg5[%c4, %c0_8], %12 {strides = array<i32>} : memref<40x256xf32, #tpu.memory_space<vmem>>, vector<4x256xf32>,
    %14 = vector.extract_strided_slice %7 {offsets = [0, 0, 2], sizes = [4, 16, 16], strides = [1, 1, 1]} : vector<4x18x18xf32> to vector<4x16x16xf32>
    %15 = vector.shape_cast %14 : vector<4x16x16xf32> to vector<4x256xf32>
    %c8 = arith.constant 8 : index
    %c0_9 = arith.constant 0 : index
    %16 = vector.load %arg5[%c8, %c0_9] : memref<40x256xf32, #tpu.memory_space<vmem>>, vector<4x256xf32>
    tpu.vector_store %arg5[%c8, %c0_9], %15 {strides = array<i32>} : memref<40x256xf32, #tpu.memory_space<vmem>>, vector<4x256xf32>,
    %17 = vector.extract_strided_slice %7 {offsets = [0, 1, 0], sizes = [4, 16, 16], strides = [1, 1, 1]} : vector<4x18x18xf32> to vector<4x16x16xf32>
    %18 = vector.shape_cast %17 : vector<4x16x16xf32> to vector<4x256xf32>
    %c12 = arith.constant 12 : index
    %c0_10 = arith.constant 0 : index
    %19 = vector.load %arg5[%c12, %c0_10] : memref<40x256xf32, #tpu.memory_space<vmem>>, vector<4x256xf32>
    tpu.vector_store %arg5[%c12, %c0_10], %18 {strides = array<i32>} : memref<40x256xf32, #tpu.memory_space<vmem>>, vector<4x256xf32>,
    %20 = vector.extract_strided_slice %7 {offsets = [0, 1, 1], sizes = [4, 16, 16], strides = [1, 1, 1]} : vector<4x18x18xf32> to vector<4x16x16xf32>
    %21 = vector.shape_cast %20 : vector<4x16x16xf32> to vector<4x256xf32>
    %c16 = arith.constant 16 : index
    %c0_11 = arith.constant 0 : index
    %22 = vector.load %arg5[%c16, %c0_11] : memref<40x256xf32, #tpu.memory_space<vmem>>, vector<4x256xf32>
    tpu.vector_store %arg5[%c16, %c0_11], %21 {strides = array<i32>} : memref<40x256xf32, #tpu.memory_space<vmem>>, vector<4x256xf32>,
    %23 = vector.extract_strided_slice %7 {offsets = [0, 1, 2], sizes = [4, 16, 16], strides = [1, 1, 1]} : vector<4x18x18xf32> to vector<4x16x16xf32>
    %24 = vector.shape_cast %23 : vector<4x16x16xf32> to vector<4x256xf32>
    %c20 = arith.constant 20 : index
    %c0_12 = arith.constant 0 : index
    %25 = vector.load %arg5[%c20, %c0_12] : memref<40x256xf32, #tpu.memory_space<vmem>>, vector<4x256xf32>
    tpu.vector_store %arg5[%c20, %c0_12], %24 {strides = array<i32>} : memref<40x256xf32, #tpu.memory_space<vmem>>, vector<4x256xf32>,
    %26 = vector.extract_strided_slice %7 {offsets = [0, 2, 0], sizes = [4, 16, 16], strides = [1, 1, 1]} : vector<4x18x18xf32> to vector<4x16x16xf32>
    %27 = vector.shape_cast %26 : vector<4x16x16xf32> to vector<4x256xf32>
    %c24 = arith.constant 24 : index
    %c0_13 = arith.constant 0 : index
    %28 = vector.load %arg5[%c24, %c0_13] : memref<40x256xf32, #tpu.memory_space<vmem>>, vector<4x256xf32>
    tpu.vector_store %arg5[%c24, %c0_13], %27 {strides = array<i32>} : memref<40x256xf32, #tpu.memory_space<vmem>>, vector<4x256xf32>,
    %29 = vector.extract_strided_slice %7 {offsets = [0, 2, 1], sizes = [4, 16, 16], strides = [1, 1, 1]} : vector<4x18x18xf32> to vector<4x16x16xf32>
    %30 = vector.shape_cast %29 : vector<4x16x16xf32> to vector<4x256xf32>
    %c28 = arith.constant 28 : index
    %c0_14 = arith.constant 0 : index
    %31 = vector.load %arg5[%c28, %c0_14] : memref<40x256xf32, #tpu.memory_space<vmem>>, vector<4x256xf32>
    tpu.vector_store %arg5[%c28, %c0_14], %30 {strides = array<i32>} : memref<40x256xf32, #tpu.memory_space<vmem>>, vector<4x256xf32>,
    %32 = vector.extract_strided_slice %7 {offsets = [0, 2, 2], sizes = [4, 16, 16], strides = [1, 1, 1]} : vector<4x18x18xf32> to vector<4x16x16xf32>
    %33 = vector.shape_cast %32 : vector<4x16x16xf32> to vector<4x256xf32>
    %c32 = arith.constant 32 : index
    %c0_15 = arith.constant 0 : index
    %34 = vector.load %arg5[%c32, %c0_15] : memref<40x256xf32, #tpu.memory_space<vmem>>, vector<4x256xf32>
    tpu.vector_store %arg5[%c32, %c0_15], %33 {strides = array<i32>} : memref<40x256xf32, #tpu.memory_space<vmem>>, vector<4x256xf32>,
    %c0_16 = arith.constant 0 : index
    %c0_17 = arith.constant 0 : index
    %35 = vector.load %arg2[%c0_16, %c0_17] : memref<8x40xf32, #tpu.memory_space<vmem>>, vector<8x40xf32>
    %c0_18 = arith.constant 0 : index
    %c0_19 = arith.constant 0 : index
    %36 = vector.load %arg5[%c0_18, %c0_19] : memref<40x256xf32, #tpu.memory_space<vmem>>, vector<40x256xf32>
    %cst_20 = arith.constant dense<0.000000e+00> : vector<8x256xf32>
    %37 = tpu.matmul %35, %36, %cst_20 {dimension_numbers = #tpu.dot_dimension_numbers<[1], [0], [0], [1], [0, 0, 1, 1], [], []>} : vector<8x40xf32>, vector<40x256xf32>, vector<8x256xf32> -> vector<8x256xf32>
    %c0_21 = arith.constant 0 : index
    %c0_22 = arith.constant 0 : index
    %38 = vector.load %arg3[%c0_21, %c0_22] : memref<8x1xf32, #tpu.memory_space<vmem>>, vector<8x1xf32>
    %39 = vector.broadcast %38 : vector<8x1xf32> to vector<8x256xf32>
    %40 = arith.addf %37, %39 : vector<8x256xf32>
    %cst_23 = arith.constant 0.000000e+00 : f32
    %41 = vector.broadcast %cst_23 : f32 to vector<8x256xf32>
    %42 = arith.maximumf %40, %41 : vector<8x256xf32>
    %c0_24 = arith.constant 0 : index
    %c0_25 = arith.constant 0 : index
    %c0_26 = arith.constant 0 : index
    %43 = vector.load %arg4[%c0_24, %c0_25, %c0_26] : memref<1x8x256xf32, #tpu.memory_space<vmem>>, vector<1x8x256xf32>
    %44 = vector.shape_cast %43 : vector<1x8x256xf32> to vector<8x256xf32>
    %45 = vector.shape_cast %42 : vector<8x256xf32> to vector<1x8x256xf32>
    tpu.vector_store %arg4[%c0_24, %c0_25, %c0_26], %45 {strides = array<i32>} : memref<1x8x256xf32, #tpu.memory_space<vmem>>, vector<1x8x256xf32>,
    return
  }
  func.func @transform_0(%arg0: i32) -> (i32, i32, i32, i32) {
    %c0_i32 = arith.constant 0 : i32
    %c0_i32_0 = arith.constant 0 : i32
    %c0_i32_1 = arith.constant 0 : i32
    %c0_i32_2 = arith.constant 0 : i32
    return %arg0, %c0_i32, %c0_i32_0, %c0_i32_1 : i32, i32, i32, i32
  }
  func.func @transform_1(%arg0: i32) -> (i32, i32) {
    %c0_i32 = arith.constant 0 : i32
    %c0_i32_0 = arith.constant 0 : i32
    %c0_i32_1 = arith.constant 0 : i32
    return %c0_i32, %c0_i32_0 : i32, i32
  }
  func.func @transform_2(%arg0: i32) -> (i32, i32) {
    %c0_i32 = arith.constant 0 : i32
    %c0_i32_0 = arith.constant 0 : i32
    %c0_i32_1 = arith.constant 0 : i32
    return %c0_i32, %c0_i32_0 : i32, i32
  }
  func.func @transform_3(%arg0: i32) -> (i32, i32, i32) {
    %c0_i32 = arith.constant 0 : i32
    %c0_i32_0 = arith.constant 0 : i32
    %c0_i32_1 = arith.constant 0 : i32
    return %arg0, %c0_i32, %c0_i32_0 : i32, i32, i32
  }
}

</mosaic_0001>

<llo_original>
// kernel: tpu_custom_call.1
$region0: #{tpu_custom_call.1}
  #allocation0 [shape = 'u32[]', space=smem, size = 0x4, offset = 0x4, fixed_abs, tag = 'smem constant byte address 0x4 - core index']
  #allocation1 [shape = 'u32[72,128]{1,0:T(1,128)}', space=vmem, size = 0x9000, scoped, tag = 'internal scratch']
  #allocation2 [shape = 'f32[40,256]{1,0:T(8,128)}', space=vmem, size = 0xa000, scoped, tag = 'scratch operand']
  %s0 = inlined_call_operand.hbm [shape: f32[2,4,16,16], index: 0, kind: input, shape index: {}]
  %s1 = inlined_call_operand.vmem [shape: f32[8,40], index: 1, kind: input, shape index: {}]
  %s2 = inlined_call_operand.vmem [shape: f32[8,1], index: 2, kind: input, shape index: {}]
  %s3 = inlined_call_operand.hbm [shape: f32[2,8,256], index: 3, kind: output, shape index: {}]
  %s4 = sld [smem:[#allocation0]]
  $region49: #{tpu_custom_call.1} parent=0
    _
  %s6 = ssub.s32 1, %s4
  %s7 = scalar_select 0, %s6, %s4
  $region1: #{tpu_custom_call.1} parent=0
    #allocation3 [shape = 'u8[65536]{0}', space=vmem, size = 0x10000, scoped, tag = 'input window, operand 0']
    #allocation4 [shape = 's32[2]{0}', space=sflag, size = 0x8, scoped, tag = 'scoped memory for tpu_custom_call.1']
    #allocation5 [shape = 's32[2]{0}', space=sflag, size = 0x8, scoped, tag = 'scoped memory for tpu_custom_call.1']
    #allocation6 [shape = 'u8[16384]{0}', space=vmem, size = 0x4000, scoped, tag = 'output window, operand 0']
    %8 = vsyncpa [#allocation4], 0
    %s9 = scalar_lea.sflag [#allocation4], 1
    %10 = vsyncpa %s9, 0
    %11 = vsyncpa [#allocation5], 0
    %s12 = scalar_lea.sflag [#allocation5], 1
    %13 = vsyncpa %s12, 0
    loop: start=0, step=1, limit=4
    $region2: #{tpu_custom_call.1} parent=1 // loop_pre_header
      _
    $region3: #{tpu_custom_call.1} parent=1 // loop_header
      %s15 = sphi 0, %s19
      %p16 = scmp.ge.s32.totalorder %s15, 4
      %s25 = sphi 0, %s27
      %s28 = sphi 0, %s25
      %s29 = sphi 0, %s28
      %s45 = sphi 0, %s29
      %s49 = sphi 0, %s49
      %s51 = sphi 0, %s49
      %s52 = sphi 0, %s51
      %s66 = sphi 0, %s52
      %s70 = sphi 0, %s70
      %s72 = sphi 0, %s70
      %s73 = sphi 0, %s72
      %s87 = sphi 0, %s73
      %s93 = sphi 0, %s95
      %s96 = sphi 0, %s93
      %s97 = sphi 0, %s96
      %s113 = sphi 0, %s97
    $region4: #{tpu_custom_call.1} parent=1 // loop_header_branch
      %18 = sbr.rel (%p16) target = $region8
    $region5: #{tpu_custom_call.1} parent=1 // loop_body
      %s20 = ssub.s32 %s15, 1
      %s21 = ssub.s32 %s15, 2
      %s22 = sadd.s32 %s15, 1
      %s23 = ssub.s32 %s15, %s22
      %p24 = scmp.eq.s32.totalorder %s23, 0
      %s26 = sadd.s32 %s25, 1
      %s27 = scalar_select %p24, %s25, %s26
      %p30 = pneg %p24
      %p31 = scmp.eq.s32.totalorder %s15, 1
      %p32 = por %p30, %p31
      %p33 = scmp.ne.s32.totalorder %s25, %s28
      %p34 = scmp.eq.s32.totalorder %s15, 0
      %p35 = por %p33, %p34
      %p36 = scmp.ne.s32.totalorder %s25, %s28
      %p37 = scmp.eq.s32.totalorder %s20, 1
      %p38 = por %p36, %p37
      %p39 = scmp.ne.s32.totalorder %s28, %s29
      %p40 = scmp.eq.s32.totalorder %s20, 0
      %p41 = por %p39, %p40
      %p42 = scmp.ne.s32.totalorder %s28, %s29
      %p43 = scmp.eq.s32.totalorder %s21, 1
      %p44 = por %p42, %p43
      %p46 = scmp.ne.s32.totalorder %s29, %s45
      %p47 = scmp.eq.s32.totalorder %s21, 0
      %p48 = por %p46, %p47
      %s50 = sadd.s32 %s49, 1
      %p53 = scmp.eq.s32.totalorder %s15, 1
      %p54 = scmp.ne.s32.totalorder %s49, %s51
      %p55 = scmp.eq.s32.totalorder %s15, 0
      %p56 = por %p54, %p55
      %p57 = scmp.ne.s32.totalorder %s49, %s51
      %p58 = scmp.eq.s32.totalorder %s20, 1
      %p59 = por %p57, %p58
      %p60 = scmp.ne.s32.totalorder %s51, %s52
      %p61 = scmp.eq.s32.totalorder %s20, 0
      %p62 = por %p60, %p61
      %p63 = scmp.ne.s32.totalorder %s51, %s52
      %p64 = scmp.eq.s32.totalorder %s21, 1
      %p65 = por %p63, %p64
      %p67 = scmp.ne.s32.totalorder %s52, %s66
      %p68 = scmp.eq.s32.totalorder %s21, 0
      %p69 = por %p67, %p68
      %s71 = sadd.s32 %s70, 1
      %p74 = scmp.eq.s32.totalorder %s15, 1
      %p75 = scmp.ne.s32.totalorder %s70, %s72
      %p76 = scmp.eq.s32.totalorder %s15, 0
      %p77 = por %p75, %p76
      %p78 = scmp.ne.s32.totalorder %s70, %s72
      %p79 = scmp.eq.s32.totalorder %s20, 1
      %p80 = por %p78, %p79
      %p81 = scmp.ne.s32.totalorder %s72, %s73
      %p82 = scmp.eq.s32.totalorder %s20, 0
      %p83 = por %p81, %p82
      %p84 = scmp.ne.s32.totalorder %s72, %s73
      %p85 = scmp.eq.s32.totalorder %s21, 1
      %p86 = por %p84, %p85
      %p88 = scmp.ne.s32.totalorder %s73, %s87
      %p89 = scmp.eq.s32.totalorder %s21, 0
      %p90 = por %p88, %p89
      %s91 = ssub.s32 %s15, %s22
      %p92 = scmp.eq.s32.totalorder %s91, 0
      %s94 = sadd.s32 %s93, 1
      %s95 = scalar_select %p92, %s93, %s94
      %p98 = pneg %p92
      %p99 = scmp.eq.s32.totalorder %s15, 1
      %p100 = por %p98, %p99
      %p101 = scmp.ne.s32.totalorder %s93, %s96
      %p102 = scmp.eq.s32.totalorder %s15, 0
      %p103 = por %p101, %p102
      %p104 = scmp.ne.s32.totalorder %s93, %s96
      %p105 = scmp.eq.s32.totalorder %s20, 1
      %p106 = por %p104, %p105
      %p107 = scmp.ne.s32.totalorder %s96, %s97
      %p108 = scmp.eq.s32.totalorder %s20, 0
      %p109 = por %p107, %p108
      %p110 = scmp.ne.s32.totalorder %s96, %s97
      %p111 = scmp.eq.s32.totalorder %s21, 1
      %p112 = por %p110, %p111
      %p114 = scmp.ne.s32.totalorder %s97, %s113
      %p115 = scmp.eq.s32.totalorder %s21, 0
      %p116 = por %p114, %p115
      %p117 = scmp.le.s32.totalorder 1, %s15
      %p118 = scmp.lt.s32.totalorder %s15, 3
      %p119 = pnand %p117, %p118
      %p120 = pneg %p119
      // Predicated region
      $region9: #{tpu_custom_call.1} parent=5 // pred_check
        _
      $region10: #{tpu_custom_call.1} parent=5 // pred_check_branch
        %122 = sbr.rel (%p119) target = $region12
      $region11: #{tpu_custom_call.1} parent=5 // pred_region
        %s123 = ssub.s32 %s15, 1
        // Predicated region
        $region13: #{tpu_custom_call.1} parent=11 // pred_check
          %p124 = pneg %p62
        $region14: #{tpu_custom_call.1} parent=11 // pred_check_branch
          %126 = sbr.rel (%p124) target = $region16
        $region15: #{tpu_custom_call.1} parent=11 // pred_region
          _
        $region16: #{tpu_custom_call.1} parent=11 // pred_fallthru
          _
        // Predicated region
        $region17: #{tpu_custom_call.1} parent=11 // pred_check
          %p127 = pneg %p83
        $region18: #{tpu_custom_call.1} parent=11 // pred_check_branch
          %129 = sbr.rel (%p127) target = $region20
        $region19: #{tpu_custom_call.1} parent=11 // pred_region
          _
        $region20: #{tpu_custom_call.1} parent=11 // pred_fallthru
          _
      $region12: #{tpu_custom_call.1} parent=5 // pred_fallthru
        _
      %p130 = scmp.lt.s32.totalorder %s15, 2
      // Predicated region
      $region21: #{tpu_custom_call.1} parent=5 // pred_check
        %p131 = pneg %p130
      $region22: #{tpu_custom_call.1} parent=5 // pred_check_branch
        %133 = sbr.rel (%p131) target = $region24
      $region23: #{tpu_custom_call.1} parent=5 // pred_region
        // Predicated region
        $region25: #{tpu_custom_call.1} parent=23 // pred_check
          %p134 = pneg %p35
        $region26: #{tpu_custom_call.1} parent=23 // pred_check_branch
          %136 = sbr.rel (%p134) target = $region28
        $region27: #{tpu_custom_call.1} parent=23 // pred_region
          %s137 = sand.u32 %s25, 1
          %s138 = scalar_lea.sflag [#allocation4], %s137
          %s139 = sand.u32 %s25, 1
          %s140 = smul.addr %s139, 64
          %s141 = scalar_lea.vmem [#allocation3], %s140
          %143 = vsyncadd %s138, 0
          %s144 = smul.addr %s15, 8
          %s145 = smul.addr %s144, 8
          %s146 = scalar_lea.hbm %s0, %s145
          %s147 = sshll.u32 %s146, 4
          %s148 = int_to_ptr.hbm [resolvable:$true] %s147
          %s149 = sshll.u32 %s141, 4
          %s150 = int_to_ptr.vmem [resolvable:$true] %s149
          %155 = dma.hbm_to_vmem [thread:$0]  %s148, 1024, %s150, %s138, 128, 128, 8
        $region28: #{tpu_custom_call.1} parent=23 // pred_fallthru
          _
      $region24: #{tpu_custom_call.1} parent=5 // pred_fallthru
        _
      %p156 = scmp.le.s32.totalorder 1, %s15
      %p157 = scmp.lt.s32.totalorder %s15, 3
      %p158 = pnand %p156, %p157
      %p159 = pneg %p158
      // Predicated region
      $region29: #{tpu_custom_call.1} parent=5 // pred_check
        _
      $region30: #{tpu_custom_call.1} parent=5 // pred_check_branch
        %161 = sbr.rel (%p158) target = $region32
      $region31: #{tpu_custom_call.1} parent=5 // pred_region
        %s162 = ssub.s32 %s15, 1
        %s163 = sand.u32 %s28, 1
        %s164 = scalar_lea.sflag [#allocation4], %s163
        %s165 = sand.u32 %s28, 1
        %s166 = smul.addr %s165, 64
        %s167 = scalar_lea.vmem [#allocation3], %s166
        // Predicated region
        $region33: #{tpu_custom_call.1} parent=31 // pred_check
          %p168 = pneg %p41
        $region34: #{tpu_custom_call.1} parent=31 // pred_check_branch
          %170 = sbr.rel (%p168) target = $region36
        $region35: #{tpu_custom_call.1} parent=31 // pred_region
          %172 = dma.done %s164, 1024
        $region36: #{tpu_custom_call.1} parent=31 // pred_fallthru
          _
        %s173 = sand.u32 %s28, 1
        %s174 = scalar_lea.sflag [#allocation4], %s173
        %s175 = sand.u32 %s28, 1
        %s176 = smul.addr %s175, 64
        %s177 = scalar_lea.vmem [#allocation3], %s176
        %p178 = pneg %p41
        %p179 = pneg %p38
        %p180 = pneg %p62
        %p181 = pneg %p59
        %p182 = pneg %p83
        %p183 = pneg %p80
        %p184 = pneg %p109
        %p185 = pneg %p106
        %s186 = sand.u32 %s96, 1
        %s187 = scalar_lea.sflag [#allocation5], %s186
        %s188 = sand.u32 %s96, 1
        %s189 = smul.addr %s188, 16
        %s190 = scalar_lea.vmem [#allocation6], %s189
        %191 = vst [vmem:[#allocation2 + $0x40] sm:$0xf0] 0.0
        %192 = vst [vmem:[#allocation2 + $0x48] sm:$0xf0] 0.0
        %v193 = vld [vmem:[%s167] sm:$0xff]
        %v194 = vld [vmem:[%s167 + $0x8] sm:$0xff]
        %v195 = vld [vmem:[%s167 + $0x10] sm:$0xff]
        %v196 = vld [vmem:[%s167 + $0x18] sm:$0xff]
        %v197 = vld [vmem:[%s167 + $0x20] sm:$0xff]
        %v198 = vld [vmem:[%s167 + $0x28] sm:$0xff]
        %v199 = vld [vmem:[%s167 + $0x30] sm:$0xff]
        %v200 = vld [vmem:[%s167 + $0x38] sm:$0xff]
        %209 = vrot.lane.b32.xlu0 %v193, 1
        %v210 = vpop.permute.xlu0 %209
        %211 = vrot.lane.b32.xlu0 %v194, 1
        %v212 = vpop.permute.xlu0 %211
        %213 = vrot.lane.b32.xlu0 %v195, 1
        %v214 = vpop.permute.xlu0 %213
        %215 = vrot.lane.b32.xlu0 %v196, 1
        %v216 = vpop.permute.xlu0 %215
        %217 = vrot.lane.b32.xlu0 %v197, 1
        %v218 = vpop.permute.xlu0 %217
        %219 = vrot.lane.b32.xlu0 %v198, 1
        %v220 = vpop.permute.xlu0 %219
        %221 = vrot.lane.b32.xlu0 %v199, 1
        %v222 = vpop.permute.xlu0 %221
        %223 = vrot.lane.b32.xlu0 %v200, 1
        %v224 = vpop.permute.xlu0 %223
        %vm233 = vcmask 7168
        %v234 = vsel %vm233, 0.0, %v210
        %v235 = vsel %vm233, 0.0, %v212
        %v236 = vsel %vm233, 0.0, %v214
        %v237 = vsel %vm233, 0.0, %v216
        %v238 = vsel %vm233, 0.0, %v218
        %v239 = vsel %vm233, 0.0, %v220
        %v240 = vsel %vm233, 0.0, %v222
        %v241 = vsel %vm233, 0.0, %v224
        %vm242 = vcmask 138240
        %v243 = vsel %vm242, %v234, 0.0
        %v244 = vsel %vm242, %v235, 0.0
        %v245 = vsel %vm242, %v236, 0.0
        %v246 = vsel %vm242, %v237, 0.0
        %v247 = vsel %vm242, %v238, 0.0
        %v248 = vsel %vm242, %v239, 0.0
        %v249 = vsel %vm242, %v240, 0.0
        %v250 = vsel %vm242, %v241, 0.0
        %vm259 = vcmask 1040384
        %v260 = vrot.slane %v243, 7
        %v261 = vrot.slane %v244, 7
        %v262 = vsel %vm259, %v260, %v261
        %v263 = vrot.slane %v245, 7
        %v264 = vrot.slane %v246, 7
        %v265 = vsel %vm259, %v263, %v264
        %v266 = vrot.slane %v247, 7
        %v267 = vrot.slane %v248, 7
        %v268 = vsel %vm259, %v266, %v267
        %v269 = vrot.slane %v249, 7
        %v270 = vrot.slane %v250, 7
        %v271 = vsel %vm259, %v269, %v270
        %v284 = vsel %vm259, 0.0, %v260
        %v285 = vsel %vm259, 0.0, %v263
        %v286 = vsel %vm259, 0.0, %v266
        %v287 = vsel %vm259, 0.0, %v269
        %v288 = vsel %vm259, %v261, 0.0
        %v289 = vsel %vm259, %v264, 0.0
        %v290 = vsel %vm259, %v267, 0.0
        %v291 = vsel %vm259, %v270, 0.0
        %v292 = vrot.slane %v286, 4
        %vm293 = vcmask 1047556
        %v294 = vsel %vm293, %v292, %v284
        %v295 = vrot.slane %v284, 4
        %v296 = vsel %vm293, %v286, %v295
        %v298 = vunpack.c.l.s4 1983009808
        %v299 = vunpack.c.0.s8 %v298
        %v300 = vperm.slane %v294, %v299
        %v302 = vunpack.c.l.s4 1983009808
        %v303 = vunpack.c.0.s8 %v302
        %v304 = vperm.slane %v296, %v303
        %v305 = vrot.slane %v287, 4
        %v306 = vsel %vm293, %v305, %v285
        %v307 = vrot.slane %v285, 4
        %v308 = vsel %vm293, %v287, %v307
        %v310 = vunpack.c.l.s4 1983009808
        %v311 = vunpack.c.0.s8 %v310
        %v312 = vperm.slane %v306, %v311
        %v314 = vunpack.c.l.s4 1983009808
        %v315 = vunpack.c.0.s8 %v314
        %v316 = vperm.slane %v308, %v315
        %v317 = vrot.slane %v312, 4
        %v318 = vsel %vm293, %v317, %v300
        %v319 = vrot.slane %v300, 4
        %v320 = vsel %vm293, %v312, %v319
        %v322 = vunpack.c.l.s4 1934713408
        %v323 = vunpack.c.0.s8 %v322
        %v324 = vperm.slane %v318, %v323
        %v326 = vunpack.c.l.s4 1934713408
        %v327 = vunpack.c.0.s8 %v326
        %v328 = vperm.slane %v320, %v327
        %v329 = vrot.slane %v316, 4
        %v330 = vsel %vm293, %v329, %v304
        %v331 = vrot.slane %v304, 4
        %v332 = vsel %vm293, %v316, %v331
        %v334 = vunpack.c.l.s4 1934713408
        %v335 = vunpack.c.0.s8 %v334
        %v336 = vperm.slane %v330, %v335
        %v338 = vunpack.c.l.s4 1934713408
        %v339 = vunpack.c.0.s8 %v338
        %v340 = vperm.slane %v332, %v339
        %v341 = vrot.slane %v324, 4
        %v342 = vsel %vm293, 0.0, %v341
        %v343 = vrot.slane %v328, 4
        %v344 = vsel %vm293, 0.0, %v343
        %v345 = vrot.slane %v336, 4
        %v346 = vsel %vm293, 0.0, %v345
        %v347 = vrot.slane %v340, 4
        %v348 = vsel %vm293, 0.0, %v347
        %v349 = vrot.slane %v268, 4
        %v350 = vsel %vm293, %v349, %v262
        %v351 = vrot.slane %v262, 4
        %v352 = vsel %vm293, %v268, %v351
        %v354 = vunpack.c.l.s4 1983009808
        %v355 = vunpack.c.0.s8 %v354
        %v356 = vperm.slane %v350, %v355
        %v358 = vunpack.c.l.s4 1983009808
        %v359 = vunpack.c.0.s8 %v358
        %v360 = vperm.slane %v352, %v359
        %v361 = vrot.slane %v271, 4
        %v362 = vsel %vm293, %v361, %v265
        %v363 = vrot.slane %v265, 4
        %v364 = vsel %vm293, %v271, %v363
        %v366 = vunpack.c.l.s4 1983009808
        %v367 = vunpack.c.0.s8 %v366
        %v368 = vperm.slane %v362, %v367
        %v370 = vunpack.c.l.s4 1983009808
        %v371 = vunpack.c.0.s8 %v370
        %v372 = vperm.slane %v364, %v371
        %v373 = vrot.slane %v368, 4
        %v374 = vsel %vm293, %v373, %v356
        %v375 = vrot.slane %v356, 4
        %v376 = vsel %vm293, %v368, %v375
        %v378 = vunpack.c.l.s4 1934713408
        %v379 = vunpack.c.0.s8 %v378
        %v380 = vperm.slane %v374, %v379
        %v382 = vunpack.c.l.s4 1934713408
        %v383 = vunpack.c.0.s8 %v382
        %v384 = vperm.slane %v376, %v383
        %v385 = vrot.slane %v372, 4
        %v386 = vsel %vm293, %v385, %v360
        %v387 = vrot.slane %v360, 4
        %v388 = vsel %vm293, %v372, %v387
        %v390 = vunpack.c.l.s4 1934713408
        %v391 = vunpack.c.0.s8 %v390
        %v392 = vperm.slane %v386, %v391
        %v394 = vunpack.c.l.s4 1934713408
        %v395 = vunpack.c.0.s8 %v394
        %v396 = vperm.slane %v388, %v395
        %v397 = vrot.slane %v380, 4
        %v398 = vsel %vm293, 0.0, %v397
        %v399 = vrot.slane %v384, 4
        %v400 = vsel %vm293, 0.0, %v399
        %v401 = vrot.slane %v392, 4
        %v402 = vsel %vm293, 0.0, %v401
        %v403 = vrot.slane %v396, 4
        %v404 = vsel %vm293, 0.0, %v403
        %406 = vrot.lane.b32.xlu0 %v342, 16
        %v407 = vpop.permute.xlu0 %406
        %410 = vrot.lane.b32.xlu0 %v328, 32
        %v411 = vpop.permute.xlu0 %410
        %414 = vrot.lane.b32.xlu0 %v344, 48
        %v415 = vpop.permute.xlu0 %414
        %418 = vrot.lane.b32.xlu0 %v336, 64
        %v419 = vpop.permute.xlu0 %418
        %422 = vrot.lane.b32.xlu0 %v346, 80
        %v423 = vpop.permute.xlu0 %422
        %426 = vrot.lane.b32.xlu0 %v340, 96
        %v427 = vpop.permute.xlu0 %426
        %430 = vrot.lane.b32.xlu0 %v348, 112
        %v431 = vpop.permute.xlu0 %430
        %434 = vrot.lane.b32.xlu0 %v398, 16
        %v435 = vpop.permute.xlu0 %434
        %438 = vrot.lane.b32.xlu0 %v384, 32
        %v439 = vpop.permute.xlu0 %438
        %442 = vrot.lane.b32.xlu0 %v400, 48
        %v443 = vpop.permute.xlu0 %442
        %446 = vrot.lane.b32.xlu0 %v392, 64
        %v447 = vpop.permute.xlu0 %446
        %450 = vrot.lane.b32.xlu0 %v402, 80
        %v451 = vpop.permute.xlu0 %450
        %454 = vrot.lane.b32.xlu0 %v396, 96
        %v455 = vpop.permute.xlu0 %454
        %458 = vrot.lane.b32.xlu0 %v404, 112
        %v459 = vpop.permute.xlu0 %458
        %vm461 = vcmask 130048
        %v462 = vsel %vm461, %v324, %v407
        %vm463 = vcmask 261120
        %v464 = vsel %vm463, %v462, %v411
        %vm465 = vcmask 392192
        %v466 = vsel %vm465, %v464, %v415
        %vm467 = vcmask 523264
        %v468 = vsel %vm467, %v466, %v419
        %vm469 = vcmask 654336
        %v470 = vsel %vm469, %v468, %v423
        %vm471 = vcmask 785408
        %v472 = vsel %vm471, %v470, %v427
        %vm473 = vcmask 916480
        %v474 = vsel %vm473, %v472, %v431
        %v475 = vsel %vm461, %v380, %v435
        %v476 = vsel %vm463, %v475, %v439
        %v477 = vsel %vm465, %v476, %v443
        %v478 = vsel %vm467, %v477, %v447
        %v479 = vsel %vm469, %v478, %v451
        %v480 = vsel %vm471, %v479, %v455
        %v481 = vsel %vm473, %v480, %v459
        %482 = vst [vmem:[#allocation2] sm:$0xf] %v474
        %483 = vst [vmem:[#allocation2 + $0x8] sm:$0xf] %v481
        %488 = vrot.lane.b32.xlu0 %v284, 127
        %v489 = vpop.permute.xlu0 %488
        %490 = vrot.lane.b32.xlu0 %v262, 127
        %v491 = vpop.permute.xlu0 %490
        %492 = vrot.lane.b32.xlu0 %v285, 127
        %v493 = vpop.permute.xlu0 %492
        %494 = vrot.lane.b32.xlu0 %v265, 127
        %v495 = vpop.permute.xlu0 %494
        %496 = vrot.lane.b32.xlu0 %v286, 127
        %v497 = vpop.permute.xlu0 %496
        %498 = vrot.lane.b32.xlu0 %v268, 127
        %v499 = vpop.permute.xlu0 %498
        %500 = vrot.lane.b32.xlu0 %v287, 127
        %v501 = vpop.permute.xlu0 %500
        %502 = vrot.lane.b32.xlu0 %v271, 127
        %v503 = vpop.permute.xlu0 %502
        %v512 = vrot.slane %v497, 4
        %v513 = vsel %vm293, %v512, %v489
        %v514 = vrot.slane %v489, 4
        %v515 = vsel %vm293, %v497, %v514
        %v517 = vunpack.c.l.s4 1983009808
        %v518 = vunpack.c.0.s8 %v517
        %v519 = vperm.slane %v513, %v518
        %v521 = vunpack.c.l.s4 1983009808
        %v522 = vunpack.c.0.s8 %v521
        %v523 = vperm.slane %v515, %v522
        %v524 = vrot.slane %v501, 4
        %v525 = vsel %vm293, %v524, %v493
        %v526 = vrot.slane %v493, 4
        %v527 = vsel %vm293, %v501, %v526
        %v529 = vunpack.c.l.s4 1983009808
        %v530 = vunpack.c.0.s8 %v529
        %v531 = vperm.slane %v525, %v530
        %v533 = vunpack.c.l.s4 1983009808
        %v534 = vunpack.c.0.s8 %v533
        %v535 = vperm.slane %v527, %v534
        %v536 = vrot.slane %v531, 4
        %v537 = vsel %vm293, %v536, %v519
        %v538 = vrot.slane %v519, 4
        %v539 = vsel %vm293, %v531, %v538
        %v541 = vunpack.c.l.s4 1934713408
        %v542 = vunpack.c.0.s8 %v541
        %v543 = vperm.slane %v537, %v542
        %v545 = vunpack.c.l.s4 1934713408
        %v546 = vunpack.c.0.s8 %v545
        %v547 = vperm.slane %v539, %v546
        %v548 = vrot.slane %v535, 4
        %v549 = vsel %vm293, %v548, %v523
        %v550 = vrot.slane %v523, 4
        %v551 = vsel %vm293, %v535, %v550
        %v553 = vunpack.c.l.s4 1934713408
        %v554 = vunpack.c.0.s8 %v553
        %v555 = vperm.slane %v549, %v554
        %v557 = vunpack.c.l.s4 1934713408
        %v558 = vunpack.c.0.s8 %v557
        %v559 = vperm.slane %v551, %v558
        %v560 = vrot.slane %v543, 4
        %v561 = vsel %vm293, 0.0, %v560
        %v562 = vrot.slane %v547, 4
        %v563 = vsel %vm293, 0.0, %v562
        %v564 = vrot.slane %v555, 4
        %v565 = vsel %vm293, 0.0, %v564
        %v566 = vrot.slane %v559, 4
        %v567 = vsel %vm293, 0.0, %v566
        %v568 = vrot.slane %v499, 4
        %v569 = vsel %vm293, %v568, %v491
        %v570 = vrot.slane %v491, 4
        %v571 = vsel %vm293, %v499, %v570
        %v573 = vunpack.c.l.s4 1983009808
        %v574 = vunpack.c.0.s8 %v573
        %v575 = vperm.slane %v569, %v574
        %v577 = vunpack.c.l.s4 1983009808
        %v578 = vunpack.c.0.s8 %v577
        %v579 = vperm.slane %v571, %v578
        %v580 = vrot.slane %v503, 4
        %v581 = vsel %vm293, %v580, %v495
        %v582 = vrot.slane %v495, 4
        %v583 = vsel %vm293, %v503, %v582
        %v585 = vunpack.c.l.s4 1983009808
        %v586 = vunpack.c.0.s8 %v585
        %v587 = vperm.slane %v581, %v586
        %v589 = vunpack.c.l.s4 1983009808
        %v590 = vunpack.c.0.s8 %v589
        %v591 = vperm.slane %v583, %v590
        %v592 = vrot.slane %v587, 4
        %v593 = vsel %vm293, %v592, %v575
        %v594 = vrot.slane %v575, 4
        %v595 = vsel %vm293, %v587, %v594
        %v597 = vunpack.c.l.s4 1934713408
        %v598 = vunpack.c.0.s8 %v597
        %v599 = vperm.slane %v593, %v598
        %v601 = vunpack.c.l.s4 1934713408
        %v602 = vunpack.c.0.s8 %v601
        %v603 = vperm.slane %v595, %v602
        %v604 = vrot.slane %v591, 4
        %v605 = vsel %vm293, %v604, %v579
        %v606 = vrot.slane %v579, 4
        %v607 = vsel %vm293, %v591, %v606
        %v609 = vunpack.c.l.s4 1934713408
        %v610 = vunpack.c.0.s8 %v609
        %v611 = vperm.slane %v605, %v610
        %v613 = vunpack.c.l.s4 1934713408
        %v614 = vunpack.c.0.s8 %v613
        %v615 = vperm.slane %v607, %v614
        %v616 = vrot.slane %v599, 4
        %v617 = vsel %vm293, 0.0, %v616
        %v618 = vrot.slane %v603, 4
        %v619 = vsel %vm293, 0.0, %v618
        %v620 = vrot.slane %v611, 4
        %v621 = vsel %vm293, 0.0, %v620
        %v622 = vrot.slane %v615, 4
        %v623 = vsel %vm293, 0.0, %v622
        %625 = vrot.lane.b32.xlu0 %v561, 16
        %v626 = vpop.permute.xlu0 %625
        %629 = vrot.lane.b32.xlu0 %v547, 32
        %v630 = vpop.permute.xlu0 %629
        %633 = vrot.lane.b32.xlu0 %v563, 48
        %v634 = vpop.permute.xlu0 %633
        %637 = vrot.lane.b32.xlu0 %v555, 64
        %v638 = vpop.permute.xlu0 %637
        %641 = vrot.lane.b32.xlu0 %v565, 80
        %v642 = vpop.permute.xlu0 %641
        %645 = vrot.lane.b32.xlu0 %v559, 96
        %v646 = vpop.permute.xlu0 %645
        %649 = vrot.lane.b32.xlu0 %v567, 112
        %v650 = vpop.permute.xlu0 %649
        %653 = vrot.lane.b32.xlu0 %v617, 16
        %v654 = vpop.permute.xlu0 %653
        %657 = vrot.lane.b32.xlu0 %v603, 32
        %v658 = vpop.permute.xlu0 %657
        %661 = vrot.lane.b32.xlu0 %v619, 48
        %v662 = vpop.permute.xlu0 %661
        %665 = vrot.lane.b32.xlu0 %v611, 64
        %v666 = vpop.permute.xlu0 %665
        %669 = vrot.lane.b32.xlu0 %v621, 80
        %v670 = vpop.permute.xlu0 %669
        %673 = vrot.lane.b32.xlu0 %v615, 96
        %v674 = vpop.permute.xlu0 %673
        %677 = vrot.lane.b32.xlu0 %v623, 112
        %v678 = vpop.permute.xlu0 %677
        %v680 = vsel %vm461, %v543, %v626
        %v681 = vsel %vm463, %v680, %v630
        %v682 = vsel %vm465, %v681, %v634
        %v683 = vsel %vm467, %v682, %v638
        %v684 = vsel %vm469, %v683, %v642
        %v685 = vsel %vm471, %v684, %v646
        %v686 = vsel %vm473, %v685, %v650
        %v687 = vsel %vm461, %v599, %v654
        %v688 = vsel %vm463, %v687, %v658
        %v689 = vsel %vm465, %v688, %v662
        %v690 = vsel %vm467, %v689, %v666
        %v691 = vsel %vm469, %v690, %v670
        %v692 = vsel %vm471, %v691, %v674
        %v693 = vsel %vm473, %v692, %v678
        %v696 = vrot.slane %v686, 4
        %v697 = vrot.slane %v693, 4
        %700 = vst [vmem:[#allocation2] sm:$0xf0] %v696
        %701 = vst [vmem:[#allocation2 + $0x8] sm:$0xf0] %v697
        %702 = vrot.lane.b32.xlu0 %v284, 126
        %v703 = vpop.permute.xlu0 %702
        %704 = vrot.lane.b32.xlu0 %v262, 126
        %v705 = vpop.permute.xlu0 %704
        %706 = vrot.lane.b32.xlu0 %v285, 126
        %v707 = vpop.permute.xlu0 %706
        %708 = vrot.lane.b32.xlu0 %v265, 126
        %v709 = vpop.permute.xlu0 %708
        %710 = vrot.lane.b32.xlu0 %v286, 126
        %v711 = vpop.permute.xlu0 %710
        %712 = vrot.lane.b32.xlu0 %v268, 126
        %v713 = vpop.permute.xlu0 %712
        %714 = vrot.lane.b32.xlu0 %v287, 126
        %v715 = vpop.permute.xlu0 %714
        %716 = vrot.lane.b32.xlu0 %v271, 126
        %v717 = vpop.permute.xlu0 %716
        %v726 = vrot.slane %v711, 4
        %v727 = vsel %vm293, %v726, %v703
        %v728 = vrot.slane %v703, 4
        %v729 = vsel %vm293, %v711, %v728
        %v731 = vunpack.c.l.s4 1983009808
        %v732 = vunpack.c.0.s8 %v731
        %v733 = vperm.slane %v727, %v732
        %v735 = vunpack.c.l.s4 1983009808
        %v736 = vunpack.c.0.s8 %v735
        %v737 = vperm.slane %v729, %v736
        %v738 = vrot.slane %v715, 4
        %v739 = vsel %vm293, %v738, %v707
        %v740 = vrot.slane %v707, 4
        %v741 = vsel %vm293, %v715, %v740
        %v743 = vunpack.c.l.s4 1983009808
        %v744 = vunpack.c.0.s8 %v743
        %v745 = vperm.slane %v739, %v744
        %v747 = vunpack.c.l.s4 1983009808
        %v748 = vunpack.c.0.s8 %v747
        %v749 = vperm.slane %v741, %v748
        %v750 = vrot.slane %v745, 4
        %v751 = vsel %vm293, %v750, %v733
        %v752 = vrot.slane %v733, 4
        %v753 = vsel %vm293, %v745, %v752
        %v755 = vunpack.c.l.s4 1934713408
        %v756 = vunpack.c.0.s8 %v755
        %v757 = vperm.slane %v751, %v756
        %v759 = vunpack.c.l.s4 1934713408
        %v760 = vunpack.c.0.s8 %v759
        %v761 = vperm.slane %v753, %v760
        %v762 = vrot.slane %v749, 4
        %v763 = vsel %vm293, %v762, %v737
        %v764 = vrot.slane %v737, 4
        %v765 = vsel %vm293, %v749, %v764
        %v767 = vunpack.c.l.s4 1934713408
        %v768 = vunpack.c.0.s8 %v767
        %v769 = vperm.slane %v763, %v768
        %v771 = vunpack.c.l.s4 1934713408
        %v772 = vunpack.c.0.s8 %v771
        %v773 = vperm.slane %v765, %v772
        %v774 = vrot.slane %v757, 4
        %v775 = vsel %vm293, 0.0, %v774
        %v776 = vrot.slane %v761, 4
        %v777 = vsel %vm293, 0.0, %v776
        %v778 = vrot.slane %v769, 4
        %v779 = vsel %vm293, 0.0, %v778
        %v780 = vrot.slane %v773, 4
        %v781 = vsel %vm293, 0.0, %v780
        %v782 = vrot.slane %v713, 4
        %v783 = vsel %vm293, %v782, %v705
        %v784 = vrot.slane %v705, 4
        %v785 = vsel %vm293, %v713, %v784
        %v787 = vunpack.c.l.s4 1983009808
        %v788 = vunpack.c.0.s8 %v787
        %v789 = vperm.slane %v783, %v788
        %v791 = vunpack.c.l.s4 1983009808
        %v792 = vunpack.c.0.s8 %v791
        %v793 = vperm.slane %v785, %v792
        %v794 = vrot.slane %v717, 4
        %v795 = vsel %vm293, %v794, %v709
        %v796 = vrot.slane %v709, 4
        %v797 = vsel %vm293, %v717, %v796
        %v799 = vunpack.c.l.s4 1983009808
        %v800 = vunpack.c.0.s8 %v799
        %v801 = vperm.slane %v795, %v800
        %v803 = vunpack.c.l.s4 1983009808
        %v804 = vunpack.c.0.s8 %v803
        %v805 = vperm.slane %v797, %v804
        %v806 = vrot.slane %v801, 4
        %v807 = vsel %vm293, %v806, %v789
        %v808 = vrot.slane %v789, 4
        %v809 = vsel %vm293, %v801, %v808
        %v811 = vunpack.c.l.s4 1934713408
        %v812 = vunpack.c.0.s8 %v811
        %v813 = vperm.slane %v807, %v812
        %v815 = vunpack.c.l.s4 1934713408
        %v816 = vunpack.c.0.s8 %v815
        %v817 = vperm.slane %v809, %v816
        %v818 = vrot.slane %v805, 4
        %v819 = vsel %vm293, %v818, %v793
        %v820 = vrot.slane %v793, 4
        %v821 = vsel %vm293, %v805, %v820
        %v823 = vunpack.c.l.s4 1934713408
        %v824 = vunpack.c.0.s8 %v823
        %v825 = vperm.slane %v819, %v824
        %v827 = vunpack.c.l.s4 1934713408
        %v828 = vunpack.c.0.s8 %v827
        %v829 = vperm.slane %v821, %v828
        %v830 = vrot.slane %v813, 4
        %v831 = vsel %vm293, 0.0, %v830
        %v832 = vrot.slane %v817, 4
        %v833 = vsel %vm293, 0.0, %v832
        %v834 = vrot.slane %v825, 4
        %v835 = vsel %vm293, 0.0, %v834
        %v836 = vrot.slane %v829, 4
        %v837 = vsel %vm293, 0.0, %v836
        %839 = vrot.lane.b32.xlu0 %v775, 16
        %v840 = vpop.permute.xlu0 %839
        %843 = vrot.lane.b32.xlu0 %v761, 32
        %v844 = vpop.permute.xlu0 %843
        %847 = vrot.lane.b32.xlu0 %v777, 48
        %v848 = vpop.permute.xlu0 %847
        %851 = vrot.lane.b32.xlu0 %v769, 64
        %v852 = vpop.permute.xlu0 %851
        %855 = vrot.lane.b32.xlu0 %v779, 80
        %v856 = vpop.permute.xlu0 %855
        %859 = vrot.lane.b32.xlu0 %v773, 96
        %v860 = vpop.permute.xlu0 %859
        %863 = vrot.lane.b32.xlu0 %v781, 112
        %v864 = vpop.permute.xlu0 %863
        %867 = vrot.lane.b32.xlu0 %v831, 16
        %v868 = vpop.permute.xlu0 %867
        %871 = vrot.lane.b32.xlu0 %v817, 32
        %v872 = vpop.permute.xlu0 %871
        %875 = vrot.lane.b32.xlu0 %v833, 48
        %v876 = vpop.permute.xlu0 %875
        %879 = vrot.lane.b32.xlu0 %v825, 64
        %v880 = vpop.permute.xlu0 %879
        %883 = vrot.lane.b32.xlu0 %v835, 80
        %v884 = vpop.permute.xlu0 %883
        %887 = vrot.lane.b32.xlu0 %v829, 96
        %v888 = vpop.permute.xlu0 %887
        %891 = vrot.lane.b32.xlu0 %v837, 112
        %v892 = vpop.permute.xlu0 %891
        %v894 = vsel %vm461, %v757, %v840
        %v895 = vsel %vm463, %v894, %v844
        %v896 = vsel %vm465, %v895, %v848
        %v897 = vsel %vm467, %v896, %v852
        %v898 = vsel %vm469, %v897, %v856
        %v899 = vsel %vm471, %v898, %v860
        %v900 = vsel %vm473, %v899, %v864
        %v901 = vsel %vm461, %v813, %v868
        %v902 = vsel %vm463, %v901, %v872
        %v903 = vsel %vm465, %v902, %v876
        %v904 = vsel %vm467, %v903, %v880
        %v905 = vsel %vm469, %v904, %v884
        %v906 = vsel %vm471, %v905, %v888
        %v907 = vsel %vm473, %v906, %v892
        %908 = vst [vmem:[#allocation2 + $0x10] sm:$0xf] %v900
        %909 = vst [vmem:[#allocation2 + $0x18] sm:$0xf] %v907
        %vm914 = vcmask 1046528
        %v915 = vrot.slane %v284, 1
        %v916 = vrot.slane %v262, 1
        %v917 = vsel %vm914, %v915, %v916
        %v918 = vrot.slane %v288, 1
        %v919 = vsel %vm914, %v916, %v918
        %v920 = vrot.slane %v285, 1
        %v921 = vrot.slane %v265, 1
        %v922 = vsel %vm914, %v920, %v921
        %v923 = vrot.slane %v289, 1
        %v924 = vsel %vm914, %v921, %v923
        %v925 = vrot.slane %v286, 1
        %v926 = vrot.slane %v268, 1
        %v927 = vsel %vm914, %v925, %v926
        %v928 = vrot.slane %v290, 1
        %v929 = vsel %vm914, %v926, %v928
        %v930 = vrot.slane %v287, 1
        %v931 = vrot.slane %v271, 1
        %v932 = vsel %vm914, %v930, %v931
        %v933 = vrot.slane %v291, 1
        %v934 = vsel %vm914, %v931, %v933
        %v943 = vrot.slane %v927, 4
        %v944 = vsel %vm293, %v943, %v917
        %v945 = vrot.slane %v917, 4
        %v946 = vsel %vm293, %v927, %v945
        %v948 = vunpack.c.l.s4 1983009808
        %v949 = vunpack.c.0.s8 %v948
        %v950 = vperm.slane %v944, %v949
        %v952 = vunpack.c.l.s4 1983009808
        %v953 = vunpack.c.0.s8 %v952
        %v954 = vperm.slane %v946, %v953
        %v955 = vrot.slane %v932, 4
        %v956 = vsel %vm293, %v955, %v922
        %v957 = vrot.slane %v922, 4
        %v958 = vsel %vm293, %v932, %v957
        %v960 = vunpack.c.l.s4 1983009808
        %v961 = vunpack.c.0.s8 %v960
        %v962 = vperm.slane %v956, %v961
        %v964 = vunpack.c.l.s4 1983009808
        %v965 = vunpack.c.0.s8 %v964
        %v966 = vperm.slane %v958, %v965
        %v967 = vrot.slane %v962, 4
        %v968 = vsel %vm293, %v967, %v950
        %v969 = vrot.slane %v950, 4
        %v970 = vsel %vm293, %v962, %v969
        %v972 = vunpack.c.l.s4 1934713408
        %v973 = vunpack.c.0.s8 %v972
        %v974 = vperm.slane %v968, %v973
        %v976 = vunpack.c.l.s4 1934713408
        %v977 = vunpack.c.0.s8 %v976
        %v978 = vperm.slane %v970, %v977
        %v979 = vrot.slane %v966, 4
        %v980 = vsel %vm293, %v979, %v954
        %v981 = vrot.slane %v954, 4
        %v982 = vsel %vm293, %v966, %v981
        %v984 = vunpack.c.l.s4 1934713408
        %v985 = vunpack.c.0.s8 %v984
        %v986 = vperm.slane %v980, %v985
        %v988 = vunpack.c.l.s4 1934713408
        %v989 = vunpack.c.0.s8 %v988
        %v990 = vperm.slane %v982, %v989
        %v991 = vrot.slane %v974, 4
        %v992 = vsel %vm293, 0.0, %v991
        %v993 = vrot.slane %v978, 4
        %v994 = vsel %vm293, 0.0, %v993
        %v995 = vrot.slane %v986, 4
        %v996 = vsel %vm293, 0.0, %v995
        %v997 = vrot.slane %v990, 4
        %v998 = vsel %vm293, 0.0, %v997
        %v999 = vrot.slane %v929, 4
        %v1000 = vsel %vm293, %v999, %v919
        %v1001 = vrot.slane %v919, 4
        %v1002 = vsel %vm293, %v929, %v1001
        %v1004 = vunpack.c.l.s4 1983009808
        %v1005 = vunpack.c.0.s8 %v1004
        %v1006 = vperm.slane %v1000, %v1005
        %v1008 = vunpack.c.l.s4 1983009808
        %v1009 = vunpack.c.0.s8 %v1008
        %v1010 = vperm.slane %v1002, %v1009
        %v1011 = vrot.slane %v934, 4
        %v1012 = vsel %vm293, %v1011, %v924
        %v1013 = vrot.slane %v924, 4
        %v1014 = vsel %vm293, %v934, %v1013
        %v1016 = vunpack.c.l.s4 1983009808
        %v1017 = vunpack.c.0.s8 %v1016
        %v1018 = vperm.slane %v1012, %v1017
        %v1020 = vunpack.c.l.s4 1983009808
        %v1021 = vunpack.c.0.s8 %v1020
        %v1022 = vperm.slane %v1014, %v1021
        %v1023 = vrot.slane %v1018, 4
        %v1024 = vsel %vm293, %v1023, %v1006
        %v1025 = vrot.slane %v1006, 4
        %v1026 = vsel %vm293, %v1018, %v1025
        %v1028 = vunpack.c.l.s4 1934713408
        %v1029 = vunpack.c.0.s8 %v1028
        %v1030 = vperm.slane %v1024, %v1029
        %v1032 = vunpack.c.l.s4 1934713408
        %v1033 = vunpack.c.0.s8 %v1032
        %v1034 = vperm.slane %v1026, %v1033
        %v1035 = vrot.slane %v1022, 4
        %v1036 = vsel %vm293, %v1035, %v1010
        %v1037 = vrot.slane %v1010, 4
        %v1038 = vsel %vm293, %v1022, %v1037
        %v1040 = vunpack.c.l.s4 1934713408
        %v1041 = vunpack.c.0.s8 %v1040
        %v1042 = vperm.slane %v1036, %v1041
        %v1044 = vunpack.c.l.s4 1934713408
        %v1045 = vunpack.c.0.s8 %v1044
        %v1046 = vperm.slane %v1038, %v1045
        %v1047 = vrot.slane %v1030, 4
        %v1048 = vsel %vm293, 0.0, %v1047
        %v1049 = vrot.slane %v1034, 4
        %v1050 = vsel %vm293, 0.0, %v1049
        %v1051 = vrot.slane %v1042, 4
        %v1052 = vsel %vm293, 0.0, %v1051
        %v1053 = vrot.slane %v1046, 4
        %v1054 = vsel %vm293, 0.0, %v1053
        %1056 = vrot.lane.b32.xlu0 %v992, 16
        %v1057 = vpop.permute.xlu0 %1056
        %1060 = vrot.lane.b32.xlu0 %v978, 32
        %v1061 = vpop.permute.xlu0 %1060
        %1064 = vrot.lane.b32.xlu0 %v994, 48
        %v1065 = vpop.permute.xlu0 %1064
        %1068 = vrot.lane.b32.xlu0 %v986, 64
        %v1069 = vpop.permute.xlu0 %1068
        %1072 = vrot.lane.b32.xlu0 %v996, 80
        %v1073 = vpop.permute.xlu0 %1072
        %1076 = vrot.lane.b32.xlu0 %v990, 96
        %v1077 = vpop.permute.xlu0 %1076
        %1080 = vrot.lane.b32.xlu0 %v998, 112
        %v1081 = vpop.permute.xlu0 %1080
        %1084 = vrot.lane.b32.xlu0 %v1048, 16
        %v1085 = vpop.permute.xlu0 %1084
        %1088 = vrot.lane.b32.xlu0 %v1034, 32
        %v1089 = vpop.permute.xlu0 %1088
        %1092 = vrot.lane.b32.xlu0 %v1050, 48
        %v1093 = vpop.permute.xlu0 %1092
        %1096 = vrot.lane.b32.xlu0 %v1042, 64
        %v1097 = vpop.permute.xlu0 %1096
        %1100 = vrot.lane.b32.xlu0 %v1052, 80
        %v1101 = vpop.permute.xlu0 %1100
        %1104 = vrot.lane.b32.xlu0 %v1046, 96
        %v1105 = vpop.permute.xlu0 %1104
        %1108 = vrot.lane.b32.xlu0 %v1054, 112
        %v1109 = vpop.permute.xlu0 %1108
        %v1111 = vsel %vm461, %v974, %v1057
        %v1112 = vsel %vm463, %v1111, %v1061
        %v1113 = vsel %vm465, %v1112, %v1065
        %v1114 = vsel %vm467, %v1113, %v1069
        %v1115 = vsel %vm469, %v1114, %v1073
        %v1116 = vsel %vm471, %v1115, %v1077
        %v1117 = vsel %vm473, %v1116, %v1081
        %v1118 = vsel %vm461, %v1030, %v1085
        %v1119 = vsel %vm463, %v1118, %v1089
        %v1120 = vsel %vm465, %v1119, %v1093
        %v1121 = vsel %vm467, %v1120, %v1097
        %v1122 = vsel %vm469, %v1121, %v1101
        %v1123 = vsel %vm471, %v1122, %v1105
        %v1124 = vsel %vm473, %v1123, %v1109
        %v1127 = vrot.slane %v1117, 4
        %v1128 = vrot.slane %v1124, 4
        %1131 = vst [vmem:[#allocation2 + $0x10] sm:$0xf0] %v1127
        %1132 = vst [vmem:[#allocation2 + $0x18] sm:$0xf0] %v1128
        %1133 = vrot.lane.b32.xlu0 %v917, 127
        %v1134 = vpop.permute.xlu0 %1133
        %1135 = vrot.lane.b32.xlu0 %v919, 127
        %v1136 = vpop.permute.xlu0 %1135
        %1137 = vrot.lane.b32.xlu0 %v922, 127
        %v1138 = vpop.permute.xlu0 %1137
        %1139 = vrot.lane.b32.xlu0 %v924, 127
        %v1140 = vpop.permute.xlu0 %1139
        %1141 = vrot.lane.b32.xlu0 %v927, 127
        %v1142 = vpop.permute.xlu0 %1141
        %1143 = vrot.lane.b32.xlu0 %v929, 127
        %v1144 = vpop.permute.xlu0 %1143
        %1145 = vrot.lane.b32.xlu0 %v932, 127
        %v1146 = vpop.permute.xlu0 %1145
        %1147 = vrot.lane.b32.xlu0 %v934, 127
        %v1148 = vpop.permute.xlu0 %1147
        %v1157 = vrot.slane %v1142, 4
        %v1158 = vsel %vm293, %v1157, %v1134
        %v1159 = vrot.slane %v1134, 4
        %v1160 = vsel %vm293, %v1142, %v1159
        %v1162 = vunpack.c.l.s4 1983009808
        %v1163 = vunpack.c.0.s8 %v1162
        %v1164 = vperm.slane %v1158, %v1163
        %v1166 = vunpack.c.l.s4 1983009808
        %v1167 = vunpack.c.0.s8 %v1166
        %v1168 = vperm.slane %v1160, %v1167
        %v1169 = vrot.slane %v1146, 4
        %v1170 = vsel %vm293, %v1169, %v1138
        %v1171 = vrot.slane %v1138, 4
        %v1172 = vsel %vm293, %v1146, %v1171
        %v1174 = vunpack.c.l.s4 1983009808
        %v1175 = vunpack.c.0.s8 %v1174
        %v1176 = vperm.slane %v1170, %v1175
        %v1178 = vunpack.c.l.s4 1983009808
        %v1179 = vunpack.c.0.s8 %v1178
        %v1180 = vperm.slane %v1172, %v1179
        %v1181 = vrot.slane %v1176, 4
        %v1182 = vsel %vm293, %v1181, %v1164
        %v1183 = vrot.slane %v1164, 4
        %v1184 = vsel %vm293, %v1176, %v1183
        %v1186 = vunpack.c.l.s4 1934713408
        %v1187 = vunpack.c.0.s8 %v1186
        %v1188 = vperm.slane %v1182, %v1187
        %v1190 = vunpack.c.l.s4 1934713408
        %v1191 = vunpack.c.0.s8 %v1190
        %v1192 = vperm.slane %v1184, %v1191
        %v1193 = vrot.slane %v1180, 4
        %v1194 = vsel %vm293, %v1193, %v1168
        %v1195 = vrot.slane %v1168, 4
        %v1196 = vsel %vm293, %v1180, %v1195
        %v1198 = vunpack.c.l.s4 1934713408
        %v1199 = vunpack.c.0.s8 %v1198
        %v1200 = vperm.slane %v1194, %v1199
        %v1202 = vunpack.c.l.s4 1934713408
        %v1203 = vunpack.c.0.s8 %v1202
        %v1204 = vperm.slane %v1196, %v1203
        %v1205 = vrot.slane %v1188, 4
        %v1206 = vsel %vm293, 0.0, %v1205
        %v1207 = vrot.slane %v1192, 4
        %v1208 = vsel %vm293, 0.0, %v1207
        %v1209 = vrot.slane %v1200, 4
        %v1210 = vsel %vm293, 0.0, %v1209
        %v1211 = vrot.slane %v1204, 4
        %v1212 = vsel %vm293, 0.0, %v1211
        %v1213 = vrot.slane %v1144, 4
        %v1214 = vsel %vm293, %v1213, %v1136
        %v1215 = vrot.slane %v1136, 4
        %v1216 = vsel %vm293, %v1144, %v1215
        %v1218 = vunpack.c.l.s4 1983009808
        %v1219 = vunpack.c.0.s8 %v1218
        %v1220 = vperm.slane %v1214, %v1219
        %v1222 = vunpack.c.l.s4 1983009808
        %v1223 = vunpack.c.0.s8 %v1222
        %v1224 = vperm.slane %v1216, %v1223
        %v1225 = vrot.slane %v1148, 4
        %v1226 = vsel %vm293, %v1225, %v1140
        %v1227 = vrot.slane %v1140, 4
        %v1228 = vsel %vm293, %v1148, %v1227
        %v1230 = vunpack.c.l.s4 1983009808
        %v1231 = vunpack.c.0.s8 %v1230
        %v1232 = vperm.slane %v1226, %v1231
        %v1234 = vunpack.c.l.s4 1983009808
        %v1235 = vunpack.c.0.s8 %v1234
        %v1236 = vperm.slane %v1228, %v1235
        %v1237 = vrot.slane %v1232, 4
        %v1238 = vsel %vm293, %v1237, %v1220
        %v1239 = vrot.slane %v1220, 4
        %v1240 = vsel %vm293, %v1232, %v1239
        %v1242 = vunpack.c.l.s4 1934713408
        %v1243 = vunpack.c.0.s8 %v1242
        %v1244 = vperm.slane %v1238, %v1243
        %v1246 = vunpack.c.l.s4 1934713408
        %v1247 = vunpack.c.0.s8 %v1246
        %v1248 = vperm.slane %v1240, %v1247
        %v1249 = vrot.slane %v1236, 4
        %v1250 = vsel %vm293, %v1249, %v1224
        %v1251 = vrot.slane %v1224, 4
        %v1252 = vsel %vm293, %v1236, %v1251
        %v1254 = vunpack.c.l.s4 1934713408
        %v1255 = vunpack.c.0.s8 %v1254
        %v1256 = vperm.slane %v1250, %v1255
        %v1258 = vunpack.c.l.s4 1934713408
        %v1259 = vunpack.c.0.s8 %v1258
        %v1260 = vperm.slane %v1252, %v1259
        %v1261 = vrot.slane %v1244, 4
        %v1262 = vsel %vm293, 0.0, %v1261
        %v1263 = vrot.slane %v1248, 4
        %v1264 = vsel %vm293, 0.0, %v1263
        %v1265 = vrot.slane %v1256, 4
        %v1266 = vsel %vm293, 0.0, %v1265
        %v1267 = vrot.slane %v1260, 4
        %v1268 = vsel %vm293, 0.0, %v1267
        %1270 = vrot.lane.b32.xlu0 %v1206, 16
        %v1271 = vpop.permute.xlu0 %1270
        %1274 = vrot.lane.b32.xlu0 %v1192, 32
        %v1275 = vpop.permute.xlu0 %1274
        %1278 = vrot.lane.b32.xlu0 %v1208, 48
        %v1279 = vpop.permute.xlu0 %1278
        %1282 = vrot.lane.b32.xlu0 %v1200, 64
        %v1283 = vpop.permute.xlu0 %1282
        %1286 = vrot.lane.b32.xlu0 %v1210, 80
        %v1287 = vpop.permute.xlu0 %1286
        %1290 = vrot.lane.b32.xlu0 %v1204, 96
        %v1291 = vpop.permute.xlu0 %1290
        %1294 = vrot.lane.b32.xlu0 %v1212, 112
        %v1295 = vpop.permute.xlu0 %1294
        %1298 = vrot.lane.b32.xlu0 %v1262, 16
        %v1299 = vpop.permute.xlu0 %1298
        %1302 = vrot.lane.b32.xlu0 %v1248, 32
        %v1303 = vpop.permute.xlu0 %1302
        %1306 = vrot.lane.b32.xlu0 %v1264, 48
        %v1307 = vpop.permute.xlu0 %1306
        %1310 = vrot.lane.b32.xlu0 %v1256, 64
        %v1311 = vpop.permute.xlu0 %1310
        %1314 = vrot.lane.b32.xlu0 %v1266, 80
        %v1315 = vpop.permute.xlu0 %1314
        %1318 = vrot.lane.b32.xlu0 %v1260, 96
        %v1319 = vpop.permute.xlu0 %1318
        %1322 = vrot.lane.b32.xlu0 %v1268, 112
        %v1323 = vpop.permute.xlu0 %1322
        %v1325 = vsel %vm461, %v1188, %v1271
        %v1326 = vsel %vm463, %v1325, %v1275
        %v1327 = vsel %vm465, %v1326, %v1279
        %v1328 = vsel %vm467, %v1327, %v1283
        %v1329 = vsel %vm469, %v1328, %v1287
        %v1330 = vsel %vm471, %v1329, %v1291
        %v1331 = vsel %vm473, %v1330, %v1295
        %v1332 = vsel %vm461, %v1244, %v1299
        %v1333 = vsel %vm463, %v1332, %v1303
        %v1334 = vsel %vm465, %v1333, %v1307
        %v1335 = vsel %vm467, %v1334, %v1311
        %v1336 = vsel %vm469, %v1335, %v1315
        %v1337 = vsel %vm471, %v1336, %v1319
        %v1338 = vsel %vm473, %v1337, %v1323
        %1339 = vst [vmem:[#allocation2 + $0x20] sm:$0xf] %v1331
        %1340 = vst [vmem:[#allocation2 + $0x28] sm:$0xf] %v1338
        %1341 = vrot.lane.b32.xlu0 %v917, 126
        %v1342 = vpop.permute.xlu0 %1341
        %1343 = vrot.lane.b32.xlu0 %v919, 126
        %v1344 = vpop.permute.xlu0 %1343
        %1345 = vrot.lane.b32.xlu0 %v922, 126
        %v1346 = vpop.permute.xlu0 %1345
        %1347 = vrot.lane.b32.xlu0 %v924, 126
        %v1348 = vpop.permute.xlu0 %1347
        %1349 = vrot.lane.b32.xlu0 %v927, 126
        %v1350 = vpop.permute.xlu0 %1349
        %1351 = vrot.lane.b32.xlu0 %v929, 126
        %v1352 = vpop.permute.xlu0 %1351
        %1353 = vrot.lane.b32.xlu0 %v932, 126
        %v1354 = vpop.permute.xlu0 %1353
        %1355 = vrot.lane.b32.xlu0 %v934, 126
        %v1356 = vpop.permute.xlu0 %1355
        %v1365 = vrot.slane %v1350, 4
        %v1366 = vsel %vm293, %v1365, %v1342
        %v1367 = vrot.slane %v1342, 4
        %v1368 = vsel %vm293, %v1350, %v1367
        %v1370 = vunpack.c.l.s4 1983009808
        %v1371 = vunpack.c.0.s8 %v1370
        %v1372 = vperm.slane %v1366, %v1371
        %v1374 = vunpack.c.l.s4 1983009808
        %v1375 = vunpack.c.0.s8 %v1374
        %v1376 = vperm.slane %v1368, %v1375
        %v1377 = vrot.slane %v1354, 4
        %v1378 = vsel %vm293, %v1377, %v1346
        %v1379 = vrot.slane %v1346, 4
        %v1380 = vsel %vm293, %v1354, %v1379
        %v1382 = vunpack.c.l.s4 1983009808
        %v1383 = vunpack.c.0.s8 %v1382
        %v1384 = vperm.slane %v1378, %v1383
        %v1386 = vunpack.c.l.s4 1983009808
        %v1387 = vunpack.c.0.s8 %v1386
        %v1388 = vperm.slane %v1380, %v1387
        %v1389 = vrot.slane %v1384, 4
        %v1390 = vsel %vm293, %v1389, %v1372
        %v1391 = vrot.slane %v1372, 4
        %v1392 = vsel %vm293, %v1384, %v1391
        %v1394 = vunpack.c.l.s4 1934713408
        %v1395 = vunpack.c.0.s8 %v1394
        %v1396 = vperm.slane %v1390, %v1395
        %v1398 = vunpack.c.l.s4 1934713408
        %v1399 = vunpack.c.0.s8 %v1398
        %v1400 = vperm.slane %v1392, %v1399
        %v1401 = vrot.slane %v1388, 4
        %v1402 = vsel %vm293, %v1401, %v1376
        %v1403 = vrot.slane %v1376, 4
        %v1404 = vsel %vm293, %v1388, %v1403
        %v1406 = vunpack.c.l.s4 1934713408
        %v1407 = vunpack.c.0.s8 %v1406
        %v1408 = vperm.slane %v1402, %v1407
        %v1410 = vunpack.c.l.s4 1934713408
        %v1411 = vunpack.c.0.s8 %v1410
        %v1412 = vperm.slane %v1404, %v1411
        %v1413 = vrot.slane %v1396, 4
        %v1414 = vsel %vm293, 0.0, %v1413
        %v1415 = vrot.slane %v1400, 4
        %v1416 = vsel %vm293, 0.0, %v1415
        %v1417 = vrot.slane %v1408, 4
        %v1418 = vsel %vm293, 0.0, %v1417
        %v1419 = vrot.slane %v1412, 4
        %v1420 = vsel %vm293, 0.0, %v1419
        %v1421 = vrot.slane %v1352, 4
        %v1422 = vsel %vm293, %v1421, %v1344
        %v1423 = vrot.slane %v1344, 4
        %v1424 = vsel %vm293, %v1352, %v1423
        %v1426 = vunpack.c.l.s4 1983009808
        %v1427 = vunpack.c.0.s8 %v1426
        %v1428 = vperm.slane %v1422, %v1427
        %v1430 = vunpack.c.l.s4 1983009808
        %v1431 = vunpack.c.0.s8 %v1430
        %v1432 = vperm.slane %v1424, %v1431
        %v1433 = vrot.slane %v1356, 4
        %v1434 = vsel %vm293, %v1433, %v1348
        %v1435 = vrot.slane %v1348, 4
        %v1436 = vsel %vm293, %v1356, %v1435
        %v1438 = vunpack.c.l.s4 1983009808
        %v1439 = vunpack.c.0.s8 %v1438
        %v1440 = vperm.slane %v1434, %v1439
        %v1442 = vunpack.c.l.s4 1983009808
        %v1443 = vunpack.c.0.s8 %v1442
        %v1444 = vperm.slane %v1436, %v1443
        %v1445 = vrot.slane %v1440, 4
        %v1446 = vsel %vm293, %v1445, %v1428
        %v1447 = vrot.slane %v1428, 4
        %v1448 = vsel %vm293, %v1440, %v1447
        %v1450 = vunpack.c.l.s4 1934713408
        %v1451 = vunpack.c.0.s8 %v1450
        %v1452 = vperm.slane %v1446, %v1451
        %v1454 = vunpack.c.l.s4 1934713408
        %v1455 = vunpack.c.0.s8 %v1454
        %v1456 = vperm.slane %v1448, %v1455
        %v1457 = vrot.slane %v1444, 4
        %v1458 = vsel %vm293, %v1457, %v1432
        %v1459 = vrot.slane %v1432, 4
        %v1460 = vsel %vm293, %v1444, %v1459
        %v1462 = vunpack.c.l.s4 1934713408
        %v1463 = vunpack.c.0.s8 %v1462
        %v1464 = vperm.slane %v1458, %v1463
        %v1466 = vunpack.c.l.s4 1934713408
        %v1467 = vunpack.c.0.s8 %v1466
        %v1468 = vperm.slane %v1460, %v1467
        %v1469 = vrot.slane %v1452, 4
        %v1470 = vsel %vm293, 0.0, %v1469
        %v1471 = vrot.slane %v1456, 4
        %v1472 = vsel %vm293, 0.0, %v1471
        %v1473 = vrot.slane %v1464, 4
        %v1474 = vsel %vm293, 0.0, %v1473
        %v1475 = vrot.slane %v1468, 4
        %v1476 = vsel %vm293, 0.0, %v1475
        %1478 = vrot.lane.b32.xlu0 %v1414, 16
        %v1479 = vpop.permute.xlu0 %1478
        %1482 = vrot.lane.b32.xlu0 %v1400, 32
        %v1483 = vpop.permute.xlu0 %1482
        %1486 = vrot.lane.b32.xlu0 %v1416, 48
        %v1487 = vpop.permute.xlu0 %1486
        %1490 = vrot.lane.b32.xlu0 %v1408, 64
        %v1491 = vpop.permute.xlu0 %1490
        %1494 = vrot.lane.b32.xlu0 %v1418, 80
        %v1495 = vpop.permute.xlu0 %1494
        %1498 = vrot.lane.b32.xlu0 %v1412, 96
        %v1499 = vpop.permute.xlu0 %1498
        %1502 = vrot.lane.b32.xlu0 %v1420, 112
        %v1503 = vpop.permute.xlu0 %1502
        %1506 = vrot.lane.b32.xlu0 %v1470, 16
        %v1507 = vpop.permute.xlu0 %1506
        %1510 = vrot.lane.b32.xlu0 %v1456, 32
        %v1511 = vpop.permute.xlu0 %1510
        %1514 = vrot.lane.b32.xlu0 %v1472, 48
        %v1515 = vpop.permute.xlu0 %1514
        %1518 = vrot.lane.b32.xlu0 %v1464, 64
        %v1519 = vpop.permute.xlu0 %1518
        %1522 = vrot.lane.b32.xlu0 %v1474, 80
        %v1523 = vpop.permute.xlu0 %1522
        %1526 = vrot.lane.b32.xlu0 %v1468, 96
        %v1527 = vpop.permute.xlu0 %1526
        %1530 = vrot.lane.b32.xlu0 %v1476, 112
        %v1531 = vpop.permute.xlu0 %1530
        %v1533 = vsel %vm461, %v1396, %v1479
        %v1534 = vsel %vm463, %v1533, %v1483
        %v1535 = vsel %vm465, %v1534, %v1487
        %v1536 = vsel %vm467, %v1535, %v1491
        %v1537 = vsel %vm469, %v1536, %v1495
        %v1538 = vsel %vm471, %v1537, %v1499
        %v1539 = vsel %vm473, %v1538, %v1503
        %v1540 = vsel %vm461, %v1452, %v1507
        %v1541 = vsel %vm463, %v1540, %v1511
        %v1542 = vsel %vm465, %v1541, %v1515
        %v1543 = vsel %vm467, %v1542, %v1519
        %v1544 = vsel %vm469, %v1543, %v1523
        %v1545 = vsel %vm471, %v1544, %v1527
        %v1546 = vsel %vm473, %v1545, %v1531
        %v1549 = vrot.slane %v1539, 4
        %v1550 = vrot.slane %v1546, 4
        %1553 = vst [vmem:[#allocation2 + $0x20] sm:$0xf0] %v1549
        %1554 = vst [vmem:[#allocation2 + $0x28] sm:$0xf0] %v1550
        %vm1555 = vcmask 1045504
        %v1556 = vrot.slane %v284, 2
        %v1557 = vrot.slane %v262, 2
        %v1558 = vsel %vm1555, %v1556, %v1557
        %v1559 = vrot.slane %v288, 2
        %v1560 = vsel %vm1555, %v1557, %v1559
        %v1561 = vrot.slane %v285, 2
        %v1562 = vrot.slane %v265, 2
        %v1563 = vsel %vm1555, %v1561, %v1562
        %v1564 = vrot.slane %v289, 2
        %v1565 = vsel %vm1555, %v1562, %v1564
        %v1566 = vrot.slane %v286, 2
        %v1567 = vrot.slane %v268, 2
        %v1568 = vsel %vm1555, %v1566, %v1567
        %v1569 = vrot.slane %v290, 2
        %v1570 = vsel %vm1555, %v1567, %v1569
        %v1571 = vrot.slane %v287, 2
        %v1572 = vrot.slane %v271, 2
        %v1573 = vsel %vm1555, %v1571, %v1572
        %v1574 = vrot.slane %v291, 2
        %v1575 = vsel %vm1555, %v1572, %v1574
        %v1584 = vrot.slane %v1568, 4
        %v1585 = vsel %vm293, %v1584, %v1558
        %v1586 = vrot.slane %v1558, 4
        %v1587 = vsel %vm293, %v1568, %v1586
        %v1589 = vunpack.c.l.s4 1983009808
        %v1590 = vunpack.c.0.s8 %v1589
        %v1591 = vperm.slane %v1585, %v1590
        %v1593 = vunpack.c.l.s4 1983009808
        %v1594 = vunpack.c.0.s8 %v1593
        %v1595 = vperm.slane %v1587, %v1594
        %v1596 = vrot.slane %v1573, 4
        %v1597 = vsel %vm293, %v1596, %v1563
        %v1598 = vrot.slane %v1563, 4
        %v1599 = vsel %vm293, %v1573, %v1598
        %v1601 = vunpack.c.l.s4 1983009808
        %v1602 = vunpack.c.0.s8 %v1601
        %v1603 = vperm.slane %v1597, %v1602
        %v1605 = vunpack.c.l.s4 1983009808
        %v1606 = vunpack.c.0.s8 %v1605
        %v1607 = vperm.slane %v1599, %v1606
        %v1608 = vrot.slane %v1603, 4
        %v1609 = vsel %vm293, %v1608, %v1591
        %v1610 = vrot.slane %v1591, 4
        %v1611 = vsel %vm293, %v1603, %v1610
        %v1613 = vunpack.c.l.s4 1934713408
        %v1614 = vunpack.c.0.s8 %v1613
        %v1615 = vperm.slane %v1609, %v1614
        %v1617 = vunpack.c.l.s4 1934713408
        %v1618 = vunpack.c.0.s8 %v1617
        %v1619 = vperm.slane %v1611, %v1618
        %v1620 = vrot.slane %v1607, 4
        %v1621 = vsel %vm293, %v1620, %v1595
        %v1622 = vrot.slane %v1595, 4
        %v1623 = vsel %vm293, %v1607, %v1622
        %v1625 = vunpack.c.l.s4 1934713408
        %v1626 = vunpack.c.0.s8 %v1625
        %v1627 = vperm.slane %v1621, %v1626
        %v1629 = vunpack.c.l.s4 1934713408
        %v1630 = vunpack.c.0.s8 %v1629
        %v1631 = vperm.slane %v1623, %v1630
        %v1632 = vrot.slane %v1615, 4
        %v1633 = vsel %vm293, 0.0, %v1632
        %v1634 = vrot.slane %v1619, 4
        %v1635 = vsel %vm293, 0.0, %v1634
        %v1636 = vrot.slane %v1627, 4
        %v1637 = vsel %vm293, 0.0, %v1636
        %v1638 = vrot.slane %v1631, 4
        %v1639 = vsel %vm293, 0.0, %v1638
        %v1640 = vrot.slane %v1570, 4
        %v1641 = vsel %vm293, %v1640, %v1560
        %v1642 = vrot.slane %v1560, 4
        %v1643 = vsel %vm293, %v1570, %v1642
        %v1645 = vunpack.c.l.s4 1983009808
        %v1646 = vunpack.c.0.s8 %v1645
        %v1647 = vperm.slane %v1641, %v1646
        %v1649 = vunpack.c.l.s4 1983009808
        %v1650 = vunpack.c.0.s8 %v1649
        %v1651 = vperm.slane %v1643, %v1650
        %v1652 = vrot.slane %v1575, 4
        %v1653 = vsel %vm293, %v1652, %v1565
        %v1654 = vrot.slane %v1565, 4
        %v1655 = vsel %vm293, %v1575, %v1654
        %v1657 = vunpack.c.l.s4 1983009808
        %v1658 = vunpack.c.0.s8 %v1657
        %v1659 = vperm.slane %v1653, %v1658
        %v1661 = vunpack.c.l.s4 1983009808
        %v1662 = vunpack.c.0.s8 %v1661
        %v1663 = vperm.slane %v1655, %v1662
        %v1664 = vrot.slane %v1659, 4
        %v1665 = vsel %vm293, %v1664, %v1647
        %v1666 = vrot.slane %v1647, 4
        %v1667 = vsel %vm293, %v1659, %v1666
        %v1669 = vunpack.c.l.s4 1934713408
        %v1670 = vunpack.c.0.s8 %v1669
        %v1671 = vperm.slane %v1665, %v1670
        %v1673 = vunpack.c.l.s4 1934713408
        %v1674 = vunpack.c.0.s8 %v1673
        %v1675 = vperm.slane %v1667, %v1674
        %v1676 = vrot.slane %v1663, 4
        %v1677 = vsel %vm293, %v1676, %v1651
        %v1678 = vrot.slane %v1651, 4
        %v1679 = vsel %vm293, %v1663, %v1678
        %v1681 = vunpack.c.l.s4 1934713408
        %v1682 = vunpack.c.0.s8 %v1681
        %v1683 = vperm.slane %v1677, %v1682
        %v1685 = vunpack.c.l.s4 1934713408
        %v1686 = vunpack.c.0.s8 %v1685
        %v1687 = vperm.slane %v1679, %v1686
        %v1688 = vrot.slane %v1671, 4
        %v1689 = vsel %vm293, 0.0, %v1688
        %v1690 = vrot.slane %v1675, 4
        %v1691 = vsel %vm293, 0.0, %v1690
        %v1692 = vrot.slane %v1683, 4
        %v1693 = vsel %vm293, 0.0, %v1692
        %v1694 = vrot.slane %v1687, 4
        %v1695 = vsel %vm293, 0.0, %v1694
        %1697 = vrot.lane.b32.xlu0 %v1633, 16
        %v1698 = vpop.permute.xlu0 %1697
        %1701 = vrot.lane.b32.xlu0 %v1619, 32
        %v1702 = vpop.permute.xlu0 %1701
        %1705 = vrot.lane.b32.xlu0 %v1635, 48
        %v1706 = vpop.permute.xlu0 %1705
        %1709 = vrot.lane.b32.xlu0 %v1627, 64
        %v1710 = vpop.permute.xlu0 %1709
        %1713 = vrot.lane.b32.xlu0 %v1637, 80
        %v1714 = vpop.permute.xlu0 %1713
        %1717 = vrot.lane.b32.xlu0 %v1631, 96
        %v1718 = vpop.permute.xlu0 %1717
        %1721 = vrot.lane.b32.xlu0 %v1639, 112
        %v1722 = vpop.permute.xlu0 %1721
        %1725 = vrot.lane.b32.xlu0 %v1689, 16
        %v1726 = vpop.permute.xlu0 %1725
        %1729 = vrot.lane.b32.xlu0 %v1675, 32
        %v1730 = vpop.permute.xlu0 %1729
        %1733 = vrot.lane.b32.xlu0 %v1691, 48
        %v1734 = vpop.permute.xlu0 %1733
        %1737 = vrot.lane.b32.xlu0 %v1683, 64
        %v1738 = vpop.permute.xlu0 %1737
        %1741 = vrot.lane.b32.xlu0 %v1693, 80
        %v1742 = vpop.permute.xlu0 %1741
        %1745 = vrot.lane.b32.xlu0 %v1687, 96
        %v1746 = vpop.permute.xlu0 %1745
        %1749 = vrot.lane.b32.xlu0 %v1695, 112
        %v1750 = vpop.permute.xlu0 %1749
        %v1752 = vsel %vm461, %v1615, %v1698
        %v1753 = vsel %vm463, %v1752, %v1702
        %v1754 = vsel %vm465, %v1753, %v1706
        %v1755 = vsel %vm467, %v1754, %v1710
        %v1756 = vsel %vm469, %v1755, %v1714
        %v1757 = vsel %vm471, %v1756, %v1718
        %v1758 = vsel %vm473, %v1757, %v1722
        %v1759 = vsel %vm461, %v1671, %v1726
        %v1760 = vsel %vm463, %v1759, %v1730
        %v1761 = vsel %vm465, %v1760, %v1734
        %v1762 = vsel %vm467, %v1761, %v1738
        %v1763 = vsel %vm469, %v1762, %v1742
        %v1764 = vsel %vm471, %v1763, %v1746
        %v1765 = vsel %vm473, %v1764, %v1750
        %1766 = vst [vmem:[#allocation2 + $0x30] sm:$0xf] %v1758
        %1767 = vst [vmem:[#allocation2 + $0x38] sm:$0xf] %v1765
        %1768 = vrot.lane.b32.xlu0 %v1558, 127
        %v1769 = vpop.permute.xlu0 %1768
        %1770 = vrot.lane.b32.xlu0 %v1560, 127
        %v1771 = vpop.permute.xlu0 %1770
        %1772 = vrot.lane.b32.xlu0 %v1563, 127
        %v1773 = vpop.permute.xlu0 %1772
        %1774 = vrot.lane.b32.xlu0 %v1565, 127
        %v1775 = vpop.permute.xlu0 %1774
        %1776 = vrot.lane.b32.xlu0 %v1568, 127
        %v1777 = vpop.permute.xlu0 %1776
        %1778 = vrot.lane.b32.xlu0 %v1570, 127
        %v1779 = vpop.permute.xlu0 %1778
        %1780 = vrot.lane.b32.xlu0 %v1573, 127
        %v1781 = vpop.permute.xlu0 %1780
        %1782 = vrot.lane.b32.xlu0 %v1575, 127
        %v1783 = vpop.permute.xlu0 %1782
        %v1792 = vrot.slane %v1777, 4
        %v1793 = vsel %vm293, %v1792, %v1769
        %v1794 = vrot.slane %v1769, 4
        %v1795 = vsel %vm293, %v1777, %v1794
        %v1797 = vunpack.c.l.s4 1983009808
        %v1798 = vunpack.c.0.s8 %v1797
        %v1799 = vperm.slane %v1793, %v1798
        %v1801 = vunpack.c.l.s4 1983009808
        %v1802 = vunpack.c.0.s8 %v1801
        %v1803 = vperm.slane %v1795, %v1802
        %v1804 = vrot.slane %v1781, 4
        %v1805 = vsel %vm293, %v1804, %v1773
        %v1806 = vrot.slane %v1773, 4
        %v1807 = vsel %vm293, %v1781, %v1806
        %v1809 = vunpack.c.l.s4 1983009808
        %v1810 = vunpack.c.0.s8 %v1809
        %v1811 = vperm.slane %v1805, %v1810
        %v1813 = vunpack.c.l.s4 1983009808
        %v1814 = vunpack.c.0.s8 %v1813
        %v1815 = vperm.slane %v1807, %v1814
        %v1816 = vrot.slane %v1811, 4
        %v1817 = vsel %vm293, %v1816, %v1799
        %v1818 = vrot.slane %v1799, 4
        %v1819 = vsel %vm293, %v1811, %v1818
        %v1821 = vunpack.c.l.s4 1934713408
        %v1822 = vunpack.c.0.s8 %v1821
        %v1823 = vperm.slane %v1817, %v1822
        %v1825 = vunpack.c.l.s4 1934713408
        %v1826 = vunpack.c.0.s8 %v1825
        %v1827 = vperm.slane %v1819, %v1826
        %v1828 = vrot.slane %v1815, 4
        %v1829 = vsel %vm293, %v1828, %v1803
        %v1830 = vrot.slane %v1803, 4
        %v1831 = vsel %vm293, %v1815, %v1830
        %v1833 = vunpack.c.l.s4 1934713408
        %v1834 = vunpack.c.0.s8 %v1833
        %v1835 = vperm.slane %v1829, %v1834
        %v1837 = vunpack.c.l.s4 1934713408
        %v1838 = vunpack.c.0.s8 %v1837
        %v1839 = vperm.slane %v1831, %v1838
        %v1840 = vrot.slane %v1823, 4
        %v1841 = vsel %vm293, 0.0, %v1840
        %v1842 = vrot.slane %v1827, 4
        %v1843 = vsel %vm293, 0.0, %v1842
        %v1844 = vrot.slane %v1835, 4
        %v1845 = vsel %vm293, 0.0, %v1844
        %v1846 = vrot.slane %v1839, 4
        %v1847 = vsel %vm293, 0.0, %v1846
        %v1848 = vrot.slane %v1779, 4
        %v1849 = vsel %vm293, %v1848, %v1771
        %v1850 = vrot.slane %v1771, 4
        %v1851 = vsel %vm293, %v1779, %v1850
        %v1853 = vunpack.c.l.s4 1983009808
        %v1854 = vunpack.c.0.s8 %v1853
        %v1855 = vperm.slane %v1849, %v1854
        %v1857 = vunpack.c.l.s4 1983009808
        %v1858 = vunpack.c.0.s8 %v1857
        %v1859 = vperm.slane %v1851, %v1858
        %v1860 = vrot.slane %v1783, 4
        %v1861 = vsel %vm293, %v1860, %v1775
        %v1862 = vrot.slane %v1775, 4
        %v1863 = vsel %vm293, %v1783, %v1862
        %v1865 = vunpack.c.l.s4 1983009808
        %v1866 = vunpack.c.0.s8 %v1865
        %v1867 = vperm.slane %v1861, %v1866
        %v1869 = vunpack.c.l.s4 1983009808
        %v1870 = vunpack.c.0.s8 %v1869
        %v1871 = vperm.slane %v1863, %v1870
        %v1872 = vrot.slane %v1867, 4
        %v1873 = vsel %vm293, %v1872, %v1855
        %v1874 = vrot.slane %v1855, 4
        %v1875 = vsel %vm293, %v1867, %v1874
        %v1877 = vunpack.c.l.s4 1934713408
        %v1878 = vunpack.c.0.s8 %v1877
        %v1879 = vperm.slane %v1873, %v1878
        %v1881 = vunpack.c.l.s4 1934713408
        %v1882 = vunpack.c.0.s8 %v1881
        %v1883 = vperm.slane %v1875, %v1882
        %v1884 = vrot.slane %v1871, 4
        %v1885 = vsel %vm293, %v1884, %v1859
        %v1886 = vrot.slane %v1859, 4
        %v1887 = vsel %vm293, %v1871, %v1886
        %v1889 = vunpack.c.l.s4 1934713408
        %v1890 = vunpack.c.0.s8 %v1889
        %v1891 = vperm.slane %v1885, %v1890
        %v1893 = vunpack.c.l.s4 1934713408
        %v1894 = vunpack.c.0.s8 %v1893
        %v1895 = vperm.slane %v1887, %v1894
        %v1896 = vrot.slane %v1879, 4
        %v1897 = vsel %vm293, 0.0, %v1896
        %v1898 = vrot.slane %v1883, 4
        %v1899 = vsel %vm293, 0.0, %v1898
        %v1900 = vrot.slane %v1891, 4
        %v1901 = vsel %vm293, 0.0, %v1900
        %v1902 = vrot.slane %v1895, 4
        %v1903 = vsel %vm293, 0.0, %v1902
        %1905 = vrot.lane.b32.xlu0 %v1841, 16
        %v1906 = vpop.permute.xlu0 %1905
        %1909 = vrot.lane.b32.xlu0 %v1827, 32
        %v1910 = vpop.permute.xlu0 %1909
        %1913 = vrot.lane.b32.xlu0 %v1843, 48
        %v1914 = vpop.permute.xlu0 %1913
        %1917 = vrot.lane.b32.xlu0 %v1835, 64
        %v1918 = vpop.permute.xlu0 %1917
        %1921 = vrot.lane.b32.xlu0 %v1845, 80
        %v1922 = vpop.permute.xlu0 %1921
        %1925 = vrot.lane.b32.xlu0 %v1839, 96
        %v1926 = vpop.permute.xlu0 %1925
        %1929 = vrot.lane.b32.xlu0 %v1847, 112
        %v1930 = vpop.permute.xlu0 %1929
        %1933 = vrot.lane.b32.xlu0 %v1897, 16
        %v1934 = vpop.permute.xlu0 %1933
        %1937 = vrot.lane.b32.xlu0 %v1883, 32
        %v1938 = vpop.permute.xlu0 %1937
        %1941 = vrot.lane.b32.xlu0 %v1899, 48
        %v1942 = vpop.permute.xlu0 %1941
        %1945 = vrot.lane.b32.xlu0 %v1891, 64
        %v1946 = vpop.permute.xlu0 %1945
        %1949 = vrot.lane.b32.xlu0 %v1901, 80
        %v1950 = vpop.permute.xlu0 %1949
        %1953 = vrot.lane.b32.xlu0 %v1895, 96
        %v1954 = vpop.permute.xlu0 %1953
        %1957 = vrot.lane.b32.xlu0 %v1903, 112
        %v1958 = vpop.permute.xlu0 %1957
        %v1960 = vsel %vm461, %v1823, %v1906
        %v1961 = vsel %vm463, %v1960, %v1910
        %v1962 = vsel %vm465, %v1961, %v1914
        %v1963 = vsel %vm467, %v1962, %v1918
        %v1964 = vsel %vm469, %v1963, %v1922
        %v1965 = vsel %vm471, %v1964, %v1926
        %v1966 = vsel %vm473, %v1965, %v1930
        %v1967 = vsel %vm461, %v1879, %v1934
        %v1968 = vsel %vm463, %v1967, %v1938
        %v1969 = vsel %vm465, %v1968, %v1942
        %v1970 = vsel %vm467, %v1969, %v1946
        %v1971 = vsel %vm469, %v1970, %v1950
        %v1972 = vsel %vm471, %v1971, %v1954
        %v1973 = vsel %vm473, %v1972, %v1958
        %v1976 = vrot.slane %v1966, 4
        %v1977 = vrot.slane %v1973, 4
        %1980 = vst [vmem:[#allocation2 + $0x30] sm:$0xf0] %v1976
        %1981 = vst [vmem:[#allocation2 + $0x38] sm:$0xf0] %v1977
        %1982 = vrot.lane.b32.xlu0 %v1558, 126
        %v1983 = vpop.permute.xlu0 %1982
        %1984 = vrot.lane.b32.xlu0 %v1560, 126
        %v1985 = vpop.permute.xlu0 %1984
        %1986 = vrot.lane.b32.xlu0 %v1563, 126
        %v1987 = vpop.permute.xlu0 %1986
        %1988 = vrot.lane.b32.xlu0 %v1565, 126
        %v1989 = vpop.permute.xlu0 %1988
        %1990 = vrot.lane.b32.xlu0 %v1568, 126
        %v1991 = vpop.permute.xlu0 %1990
        %1992 = vrot.lane.b32.xlu0 %v1570, 126
        %v1993 = vpop.permute.xlu0 %1992
        %1994 = vrot.lane.b32.xlu0 %v1573, 126
        %v1995 = vpop.permute.xlu0 %1994
        %1996 = vrot.lane.b32.xlu0 %v1575, 126
        %v1997 = vpop.permute.xlu0 %1996
        %v2006 = vrot.slane %v1991, 4
        %v2007 = vsel %vm293, %v2006, %v1983
        %v2008 = vrot.slane %v1983, 4
        %v2009 = vsel %vm293, %v1991, %v2008
        %v2011 = vunpack.c.l.s4 1983009808
        %v2012 = vunpack.c.0.s8 %v2011
        %v2013 = vperm.slane %v2007, %v2012
        %v2015 = vunpack.c.l.s4 1983009808
        %v2016 = vunpack.c.0.s8 %v2015
        %v2017 = vperm.slane %v2009, %v2016
        %v2018 = vrot.slane %v1995, 4
        %v2019 = vsel %vm293, %v2018, %v1987
        %v2020 = vrot.slane %v1987, 4
        %v2021 = vsel %vm293, %v1995, %v2020
        %v2023 = vunpack.c.l.s4 1983009808
        %v2024 = vunpack.c.0.s8 %v2023
        %v2025 = vperm.slane %v2019, %v2024
        %v2027 = vunpack.c.l.s4 1983009808
        %v2028 = vunpack.c.0.s8 %v2027
        %v2029 = vperm.slane %v2021, %v2028
        %v2030 = vrot.slane %v2025, 4
        %v2031 = vsel %vm293, %v2030, %v2013
        %v2032 = vrot.slane %v2013, 4
        %v2033 = vsel %vm293, %v2025, %v2032
        %v2035 = vunpack.c.l.s4 1934713408
        %v2036 = vunpack.c.0.s8 %v2035
        %v2037 = vperm.slane %v2031, %v2036
        %v2039 = vunpack.c.l.s4 1934713408
        %v2040 = vunpack.c.0.s8 %v2039
        %v2041 = vperm.slane %v2033, %v2040
        %v2042 = vrot.slane %v2029, 4
        %v2043 = vsel %vm293, %v2042, %v2017
        %v2044 = vrot.slane %v2017, 4
        %v2045 = vsel %vm293, %v2029, %v2044
        %v2047 = vunpack.c.l.s4 1934713408
        %v2048 = vunpack.c.0.s8 %v2047
        %v2049 = vperm.slane %v2043, %v2048
        %v2051 = vunpack.c.l.s4 1934713408
        %v2052 = vunpack.c.0.s8 %v2051
        %v2053 = vperm.slane %v2045, %v2052
        %v2054 = vrot.slane %v2037, 4
        %v2055 = vsel %vm293, 0.0, %v2054
        %v2056 = vrot.slane %v2041, 4
        %v2057 = vsel %vm293, 0.0, %v2056
        %v2058 = vrot.slane %v2049, 4
        %v2059 = vsel %vm293, 0.0, %v2058
        %v2060 = vrot.slane %v2053, 4
        %v2061 = vsel %vm293, 0.0, %v2060
        %v2062 = vrot.slane %v1993, 4
        %v2063 = vsel %vm293, %v2062, %v1985
        %v2064 = vrot.slane %v1985, 4
        %v2065 = vsel %vm293, %v1993, %v2064
        %v2067 = vunpack.c.l.s4 1983009808
        %v2068 = vunpack.c.0.s8 %v2067
        %v2069 = vperm.slane %v2063, %v2068
        %v2071 = vunpack.c.l.s4 1983009808
        %v2072 = vunpack.c.0.s8 %v2071
        %v2073 = vperm.slane %v2065, %v2072
        %v2074 = vrot.slane %v1997, 4
        %v2075 = vsel %vm293, %v2074, %v1989
        %v2076 = vrot.slane %v1989, 4
        %v2077 = vsel %vm293, %v1997, %v2076
        %v2079 = vunpack.c.l.s4 1983009808
        %v2080 = vunpack.c.0.s8 %v2079
        %v2081 = vperm.slane %v2075, %v2080
        %v2083 = vunpack.c.l.s4 1983009808
        %v2084 = vunpack.c.0.s8 %v2083
        %v2085 = vperm.slane %v2077, %v2084
        %v2086 = vrot.slane %v2081, 4
        %v2087 = vsel %vm293, %v2086, %v2069
        %v2088 = vrot.slane %v2069, 4
        %v2089 = vsel %vm293, %v2081, %v2088
        %v2091 = vunpack.c.l.s4 1934713408
        %v2092 = vunpack.c.0.s8 %v2091
        %v2093 = vperm.slane %v2087, %v2092
        %v2095 = vunpack.c.l.s4 1934713408
        %v2096 = vunpack.c.0.s8 %v2095
        %v2097 = vperm.slane %v2089, %v2096
        %v2098 = vrot.slane %v2085, 4
        %v2099 = vsel %vm293, %v2098, %v2073
        %v2100 = vrot.slane %v2073, 4
        %v2101 = vsel %vm293, %v2085, %v2100
        %v2103 = vunpack.c.l.s4 1934713408
        %v2104 = vunpack.c.0.s8 %v2103
        %v2105 = vperm.slane %v2099, %v2104
        %v2107 = vunpack.c.l.s4 1934713408
        %v2108 = vunpack.c.0.s8 %v2107
        %v2109 = vperm.slane %v2101, %v2108
        %v2110 = vrot.slane %v2093, 4
        %v2111 = vsel %vm293, 0.0, %v2110
        %v2112 = vrot.slane %v2097, 4
        %v2113 = vsel %vm293, 0.0, %v2112
        %v2114 = vrot.slane %v2105, 4
        %v2115 = vsel %vm293, 0.0, %v2114
        %v2116 = vrot.slane %v2109, 4
        %v2117 = vsel %vm293, 0.0, %v2116
        %2119 = vrot.lane.b32.xlu0 %v2055, 16
        %v2120 = vpop.permute.xlu0 %2119
        %2123 = vrot.lane.b32.xlu0 %v2041, 32
        %v2124 = vpop.permute.xlu0 %2123
        %2127 = vrot.lane.b32.xlu0 %v2057, 48
        %v2128 = vpop.permute.xlu0 %2127
        %2131 = vrot.lane.b32.xlu0 %v2049, 64
        %v2132 = vpop.permute.xlu0 %2131
        %2135 = vrot.lane.b32.xlu0 %v2059, 80
        %v2136 = vpop.permute.xlu0 %2135
        %2139 = vrot.lane.b32.xlu0 %v2053, 96
        %v2140 = vpop.permute.xlu0 %2139
        %2143 = vrot.lane.b32.xlu0 %v2061, 112
        %v2144 = vpop.permute.xlu0 %2143
        %2147 = vrot.lane.b32.xlu0 %v2111, 16
        %v2148 = vpop.permute.xlu0 %2147
        %2151 = vrot.lane.b32.xlu0 %v2097, 32
        %v2152 = vpop.permute.xlu0 %2151
        %2155 = vrot.lane.b32.xlu0 %v2113, 48
        %v2156 = vpop.permute.xlu0 %2155
        %2159 = vrot.lane.b32.xlu0 %v2105, 64
        %v2160 = vpop.permute.xlu0 %2159
        %2163 = vrot.lane.b32.xlu0 %v2115, 80
        %v2164 = vpop.permute.xlu0 %2163
        %2167 = vrot.lane.b32.xlu0 %v2109, 96
        %v2168 = vpop.permute.xlu0 %2167
        %2171 = vrot.lane.b32.xlu0 %v2117, 112
        %v2172 = vpop.permute.xlu0 %2171
        %v2174 = vsel %vm461, %v2037, %v2120
        %v2175 = vsel %vm463, %v2174, %v2124
        %v2176 = vsel %vm465, %v2175, %v2128
        %v2177 = vsel %vm467, %v2176, %v2132
        %v2178 = vsel %vm469, %v2177, %v2136
        %v2179 = vsel %vm471, %v2178, %v2140
        %v2180 = vsel %vm473, %v2179, %v2144
        %v2181 = vsel %vm461, %v2093, %v2148
        %v2182 = vsel %vm463, %v2181, %v2152
        %v2183 = vsel %vm465, %v2182, %v2156
        %v2184 = vsel %vm467, %v2183, %v2160
        %v2185 = vsel %vm469, %v2184, %v2164
        %v2186 = vsel %vm471, %v2185, %v2168
        %v2187 = vsel %vm473, %v2186, %v2172
        %2188 = vst [vmem:[#allocation2 + $0x40] sm:$0xf] %v2180
        %2189 = vst [vmem:[#allocation2 + $0x48] sm:$0xf] %v2187
        %v2190 = vld [vmem:[%s1] sm:$0xff]
        %v2191 = vld [vmem:[#allocation2] sm:$0xff]
        %v2192 = vld [vmem:[#allocation2 + $0x8] sm:$0xff]
        %v2193 = vld [vmem:[#allocation2 + $0x10] sm:$0xff]
        %v2194 = vld [vmem:[#allocation2 + $0x18] sm:$0xff]
        %v2195 = vld [vmem:[#allocation2 + $0x20] sm:$0xff]
        %v2196 = vld [vmem:[#allocation2 + $0x28] sm:$0xff]
        %v2197 = vld [vmem:[#allocation2 + $0x30] sm:$0xff]
        %v2198 = vld [vmem:[#allocation2 + $0x38] sm:$0xff]
        %v2199 = vld [vmem:[#allocation2 + $0x40] sm:$0xff]
        %v2200 = vld [vmem:[#allocation2 + $0x48] sm:$0xff]
        %v2201 = vld [vmem:[%s2] sm:$0xff]
        %2203 = vset.pattern.permute.xlu0 0
        %2204 = vperm.xlu0 %2203, %v2201
        %v2205 = vpop.permute.xlu0 %2204
        %vm2207 = vcmask 326656
        %v2209 = vsel %vm2207, %v2190, 0
        %2211 = vmatpush.msra.mxu0 0.0
        %2212 = vmatpush.msra.mxu0 0.0
        %2213 = vmatpush.msra.mxu0 0.0
        %2214 = vmatpush.msra.mxu0 0.0
        %2215 = vmatpush.msra.mxu0 0.0
        %2216 = vmatpush.msra.mxu0 0.0
        %2217 = vmatpush.msra.mxu0 0.0
        %2218 = vmatpush.msra.mxu0 0.0
        %2219 = vmatpush.msra.mxu0 0.0
        %2220 = vmatpush.msra.mxu0 0.0
        %2221 = vmatpush.msra.mxu0 0.0
        %2222 = vmatpush.msra.mxu0 %v2199
        %2223 = vmatpush.msra.mxu0 %v2197
        %2224 = vmatpush.msra.mxu0 %v2195
        %2225 = vmatpush.msra.mxu0 %v2193
        %2226 = vmatpush.msra.mxu0 %v2191
        %2227 = vmatmul.f32.gmra.mxu0 %v2209
        %v2228 = vpop.f32.mrf.mxu0
        %v2229 = vadd.f32 %v2205, %v2228
        %2230 = vdwg.mxu0
        %2231 = vmatpush.msra.mxu0 0.0
        %2232 = vmatpush.msra.mxu0 0.0
        %2233 = vmatpush.msra.mxu0 0.0
        %2234 = vmatpush.msra.mxu0 0.0
        %2235 = vmatpush.msra.mxu0 0.0
        %2236 = vmatpush.msra.mxu0 0.0
        %2237 = vmatpush.msra.mxu0 0.0
        %2238 = vmatpush.msra.mxu0 0.0
        %2239 = vmatpush.msra.mxu0 0.0
        %2240 = vmatpush.msra.mxu0 0.0
        %2241 = vmatpush.msra.mxu0 0.0
        %2242 = vmatpush.msra.mxu0 %v2200
        %2243 = vmatpush.msra.mxu0 %v2198
        %2244 = vmatpush.msra.mxu0 %v2196
        %2245 = vmatpush.msra.mxu0 %v2194
        %2246 = vmatpush.msra.mxu0 %v2192
        %2247 = vmatmul.f32.gmra.mxu0 %v2209
        %v2248 = vpop.f32.mrf.mxu0
        %v2249 = vadd.f32 %v2205, %v2248
        %2250 = vdwg.mxu0
        %v2251 = vmax.f32 %v2229, 0.0
        %v2252 = vmax.f32 %v2249, 0.0
        %2253 = vst [vmem:[%s190] sm:$0xff] %v2251
        %2254 = vst [vmem:[%s190 + $0x8] sm:$0xff] %v2252
        %s2255 = sand.u32 %s96, 1
        %s2256 = scalar_lea.sflag [#allocation5], %s2255
        %s2257 = sand.u32 %s96, 1
        %s2258 = smul.addr %s2257, 16
        %s2259 = scalar_lea.vmem [#allocation6], %s2258
        // Predicated region
        $region37: #{tpu_custom_call.1} parent=31 // pred_check
          %p2260 = pneg %p106
        $region38: #{tpu_custom_call.1} parent=31 // pred_check_branch
          %2262 = sbr.rel (%p2260) target = $region40
        $region39: #{tpu_custom_call.1} parent=31 // pred_region
          %2264 = vsyncadd %s2256, 0
          %s2265 = smul.addr %s20, 2
          %s2266 = smul.addr %s2265, 8
          %s2267 = scalar_lea.hbm %s3, %s2266
          %s2269 = sshll.u32 %s2259, 4
          %s2270 = int_to_ptr.vmem [resolvable:$true] %s2269
          %s2271 = sshll.u32 %s2267, 4
          %s2272 = int_to_ptr.hbm [resolvable:$true] %s2271
          %2274 = dma.vmem_to_hbm [thread:$0]  %s2270, 256, %s2272, %s2256
        $region40: #{tpu_custom_call.1} parent=31 // pred_fallthru
          _
      $region32: #{tpu_custom_call.1} parent=5 // pred_fallthru
        _
      %p2275 = scmp.le.s32.totalorder 2, %s15
      // Predicated region
      $region41: #{tpu_custom_call.1} parent=5 // pred_check
        %p2276 = pneg %p2275
      $region42: #{tpu_custom_call.1} parent=5 // pred_check_branch
        %2278 = sbr.rel (%p2276) target = $region44
      $region43: #{tpu_custom_call.1} parent=5 // pred_region
        %s2279 = ssub.s32 %s15, 2
        // Predicated region
        $region45: #{tpu_custom_call.1} parent=43 // pred_check
          %p2280 = pneg %p112
        $region46: #{tpu_custom_call.1} parent=43 // pred_check_branch
          %2282 = sbr.rel (%p2280) target = $region48
        $region47: #{tpu_custom_call.1} parent=43 // pred_region
          %s2283 = sand.u32 %s97, 1
          %s2284 = scalar_lea.sflag [#allocation5], %s2283
          %s2285 = sand.u32 %s97, 1
          %s2286 = smul.addr %s2285, 16
          %s2287 = scalar_lea.vmem [#allocation6], %s2286
          %2289 = dma.done %s2284, 256
        $region48: #{tpu_custom_call.1} parent=43 // pred_fallthru
          _
      $region44: #{tpu_custom_call.1} parent=5 // pred_fallthru
        _
    $region6: #{tpu_custom_call.1} parent=1 // loop_footer
      %s19 = sadd.s32 1, %s15
    $region7: #{tpu_custom_call.1} parent=1 // loop_footer_branch
      %14 = sbr.rel target = $region3
    $region8: #{tpu_custom_call.1} parent=1 // loop_exit
      _
    %2290 = vsyncpa [#allocation4], 1
    %s2291 = scalar_lea.sflag [#allocation4], 1
    %2292 = vsyncpa %s2291, 1
    %2293 = vsyncpa [#allocation5], 1
    %s2294 = scalar_lea.sflag [#allocation5], 1
    %2295 = vsyncpa %s2294, 1

</llo_original>
